<compile_context>
chip_gen: v5e
topology: v5e:2x2
jax: 0.10.0
libtpu: 0.0.40
codegen_flags: <defaults>
</compile_context>

<pallas_src>
import math
import sys

import numpy as np
import jax
import jax.numpy as jnp
from jax.experimental import pallas as pl
from jax.experimental.pallas import tpu as pltpu


# ----------------------------- Pallas kernel ---------------------------------

def _roi_align_group_kernel(src_ref, wy_ref, wx_ref, f_ref, o_ref):
    """One grid step = one group of G boxes sharing a single (level, image) feature tile.

    wy_ref: (1, G, P, H)       per-box bilinear row weights (zero for dummy slots)
    wx_ref: (1, W, G*P)        grouped, pre-transposed column weights (matmul-1 RHS)
    f_ref : (1, tc*H, W)       channel tile of one image's features, rows ordered (c, h)
    o_ref : (1, 1, G*P, tc*P)  lane-dense output block, rows (b, p), cols (c, q)
    """
    del src_ref                       # consumed only by the feature index_map
    wyg = wy_ref[0]                   # (G, P, H)
    wxg = wx_ref[0]                   # (W, G*P)
    f2 = f_ref[0]                     # (tc*H, W)
    G, P, H = wyg.shape
    tc = f2.shape[0] // H

    # 1) Grouped contraction over W: one well-filled MXU matmul (N = G*P).
    r = jnp.dot(f2, wxg, preferred_element_type=jnp.float32)          # (tc*H, G*P)

    # 2) Per-box contraction over H (~P/W of the flops), fused across the channel tile:
    #    a single (P, H) x (H, tc*P) matmul per box instead of tc tiny (P,H)x(H,P) dots.
    for b in range(G):
        rb = r[:, b * P:(b + 1) * P]                                   # (tc*H, P)
        if tc == 1:
            rbt = rb                                                   # (H, P)
        else:
            # TODO(synk): for very large channel tiles an XLU transpose of r would be
            # cheaper than this per-box lane concat.
            rbt = jnp.concatenate(
                [rb[c * H:(c + 1) * H, :] for c in range(tc)], axis=1)  # (H, tc*P)
        wy_b = wyg[b].astype(rbt.dtype)                                # (P, H)
        out_b = jnp.dot(wy_b, rbt, preferred_element_type=jnp.float32)  # (P, tc*P)
        o_ref[0, 0, b * P:(b + 1) * P, :] = out_b.astype(o_ref.dtype)


# --------------------------- kernel configuration -----------------------------

def _vmem_capacity_bytes():
    try:
        return int(pltpu.get_tpu_info().vmem_capacity_bytes)
    except Exception:
        return 64 * 1024 * 1024            # conservative (v7x per-TC size)


def _choose_channel_block(C, H, W, itemsize, budget_bytes, requested=None):
    """Channel tile tc: divisor of C with tc == C or (tc*H) % 8 == 0 (legal BlockSpec).

    Prefers the largest valid divisor whose (tc*H, W) feature block fits `budget_bytes`
    (so double-buffered blocks stay well inside VMEM), i.e. tc = C / ncb = 1 when it fits.
    """
    # TODO(synk): non-composite channel counts fall back to tc = C; padding the channel
    # dimension would allow finer tiling there.
    divisors = [d for d in range(1, C + 1) if C % d == 0]
    valid = [d for d in divisors if d == C or (d * H) % 8 == 0]
    if requested is not None:
        cand = [d for d in valid if d >= requested]
        return min(cand) if cand else C
    fits = [d for d in valid if d * H * W * itemsize <= budget_bytes]
    return max(fits) if fits else min(valid)


def _roi_align_level(feat2d, wy_g, wx_g, src_group, *, num_channels, out_dtype,
                     channel_block, feat_budget_bytes, vmem_limit_bytes):
    """ROIAlign for one FPN level.

    feat2d:    (N, C*H, W)        level features, rows ordered (c, h)  (no padding)
    wy_g:      (n_groups, G, P, H) per-slot row weights (zero rows for dummy slots)
    wx_g:      (n_groups, W, G*P)  grouped, pre-transposed column weights
    src_group: (n_groups,) int32   image index of each group (scalar prefetch)
    returns    (n_groups*G, C, P, P)
    """
    N, CH, W = feat2d.shape
    C = num_channels
    H = CH // C
    n_groups, G, P, _ = wy_g.shape
    tc = _choose_channel_block(C, H, W, feat2d.dtype.itemsize,
                               feat_budget_bytes, channel_block)
    ncb = C // tc

    grid_spec = pltpu.PrefetchScalarGridSpec(
        num_scalar_prefetch=1,
        # Channel-tile axis outermost: for a fixed tile, consecutive groups ordered by
        # image reuse the feature DMA (Pallas skips refetching an unchanged block).
        grid=(ncb, n_groups),
        in_specs=[
            pl.BlockSpec((1, G, P, H), lambda ct, g, src: (g, 0, 0, 0)),
            pl.BlockSpec((1, W, G * P), lambda ct, g, src: (g, 0, 0)),
            # data-dependent image selection + channel tiling
            pl.BlockSpec((1, tc * H, W), lambda ct, g, src: (src[g], ct, 0)),
        ],
        # lane-dense output block: full last-two dims -> unmasked, contiguous writeback
        out_specs=pl.BlockSpec((1, 1, G * P, tc * P),
                               lambda ct, g, src: (g, ct, 0, 0)),
    )
    out = pl.pallas_call(
        _roi_align_group_kernel,
        out_shape=jax.ShapeDtypeStruct((n_groups, ncb, G * P, tc * P), out_dtype),
        grid_spec=grid_spec,
        compiler_params=pltpu.CompilerParams(
            dimension_semantics=("parallel", "parallel"),
            vmem_limit_bytes=vmem_limit_bytes),
    )(src_group, wy_g, wx_g, feat2d)

    # (n_groups, ncb, G*P, tc*P) with rows (b, p) / cols (c, q)  ->  (n_groups*G, C, P, P)
    out = out.reshape(n_groups, ncb, G, P, tc, P)
    out = out.transpose(0, 2, 1, 4, 3, 5).reshape(n_groups * G, C, P, P)
    return out


# -------------------- separable ROIAlign bilinear weight matrices ---------------

def _bilinear_weights(start, bin_size, P, sr, size, grid_size):
    """(M, P, grid_size) bilinear weight matrix, averaged over `sr` samples per bin."""
    size_i = jnp.reshape(jnp.asarray(size, jnp.int32), (-1, 1, 1))
    size_f = size_i.astype(jnp.float32)
    ph = jnp.arange(P, dtype=jnp.float32)
    it = jnp.arange(sr, dtype=jnp.float32)
    coord = (start[:, None, None]
             + ph[None, :, None] * bin_size[:, None, None]
             + (it[None, None, :] + 0.5) * bin_size[:, None, None] / sr)    # (M, P, sr)
    valid = ((coord >= -1.0) & (coord <= size_f)).astype(jnp.float32)
    c = jnp.maximum(coord, 0.0)
    low = jnp.floor(c).astype(jnp.int32)
    at_end = low >= size_i - 1
    low = jnp.where(at_end, size_i - 1, low)
    high = jnp.where(at_end, size_i - 1, low + 1)
    c = jnp.where(at_end, low.astype(jnp.float32), c)
    l = c - low.astype(jnp.float32)
    h = 1.0 - l
    grid = jnp.arange(grid_size)
    onehot_low = (low[..., None] == grid).astype(jnp.float32)               # (M,P,sr,grid)
    onehot_high = (high[..., None] == grid).astype(jnp.float32)
    w = ((h * valid)[..., None] * onehot_low
         + (l * valid)[..., None] * onehot_high).sum(axis=2) / sr
    return w


def _roi_align_weight_mats(boxes, scale, P, sr, size_h, size_w, aligned,
                           grid_h, grid_w):
    scale = jnp.asarray(scale, jnp.float32)
    offset = 0.5 if aligned else 0.0
    x0 = boxes[:, 0] * scale - offset
    y0 = boxes[:, 1] * scale - offset
    x1 = boxes[:, 2] * scale - offset
    y1 = boxes[:, 3] * scale - offset
    roi_w = x1 - x0
    roi_h = y1 - y0
    if not aligned:
        roi_w = jnp.maximum(roi_w, 1.0)
        roi_h = jnp.maximum(roi_h, 1.0)
    wy = _bilinear_weights(y0, roi_h / P, P, sr, size_h, grid_h)
    wx = _bilinear_weights(x0, roi_w / P, P, sr, size_w, grid_w)
    return wy, wx


# ------------------------------- ROIPooler ------------------------------------

class ROIPoolerPallas:
    def __init__(self, output_size, scales, sampling_ratio,
                 pooler_type="ROIAlignV2",
                 canonical_box_size=224, canonical_level=4,
                 channel_block=None, group_size=None, compute_dtype=None):
        if isinstance(output_size, int):
            output_size = (output_size, output_size)
        assert len(output_size) == 2 and output_size[0] == output_size[1]
        self.output_size = output_size
        assert pooler_type in ("ROIAlign", "ROIAlignV2"), \
            "only ROIAlign / ROIAlignV2 implemented"
        # TODO(synk): ROIPool and ROIAlignRotated level poolers are not implemented.
        self.aligned = (pooler_type == "ROIAlignV2")
        assert sampling_ratio > 0
        # TODO(synk): sampling_ratio==0 (adaptive per-box sample grid) is data-dependent;
        # unsupported.
        self.sampling_ratio = int(sampling_ratio)
        self.scales = list(scales)
        min_level = -math.log2(scales[0])
        max_level = -math.log2(scales[-1])
        assert math.isclose(min_level, int(min_level)) and math.isclose(max_level, int(max_level))
        self.min_level = int(min_level)
        self.max_level = int(max_level)
        assert len(scales) == self.max_level - self.min_level + 1
        if len(scales) > 1:
            assert self.min_level <= canonical_level <= self.max_level
        self.canonical_level = canonical_level
        self.canonical_box_size = canonical_box_size
        # TODO(synk): assign_crit='ratio' needs Instances.image_size; only 'area' supported.
        self.channel_block = channel_block
        self.group_size = group_size            # boxes per grid step; default ceil(128/P)
        self.compute_dtype = compute_dtype      # e.g. jnp.bfloat16 on v6e/v7x; default f32

    def _assign_levels(self, boxes):
        areas = (boxes[:, 2] - boxes[:, 0]) * (boxes[:, 3] - boxes[:, 1])
        box_sizes = jnp.sqrt(areas)
        eps = sys.float_info.epsilon
        lvl = jnp.floor(self.canonical_level +
                        jnp.log2(box_sizes / self.canonical_box_size + eps))
        lvl = jnp.clip(lvl, self.min_level, self.max_level)
        return (lvl - self.min_level).astype(jnp.int32)

    def __call__(self, x, box_lists):
        """x: list of (N, C, H_l, W_l) arrays; box_lists: list (len N) of (n_i, 4) boxes."""
        num_levels = len(self.scales)
        assert isinstance(x, list) and isinstance(box_lists, list)
        assert len(x) == num_levels
        assert len(box_lists) == x[0].shape[0]
        N, C = int(x[0].shape[0]), int(x[0].shape[1])
        P = self.output_size[0]
        out_dtype = x[0].dtype

        boxes = jnp.concatenate(box_lists, axis=0).astype(jnp.float32)
        M = int(boxes.shape[0])
        out = jnp.zeros((M, C, P, P), out_dtype)
        if M == 0:
            return out
        batch_np = np.concatenate([np.full((int(b.shape[0]),), i, dtype=np.int64)
                                   for i, b in enumerate(box_lists)])

        if num_levels == 1:
            levels_np = np.zeros((M,), np.int64)
        else:
            # TODO(synk): host-side level grouping mirrors the data-dependent torch.nonzero
            # dispatch of the reference module; this wrapper is therefore not jit-traceable.
            levels_np = np.asarray(jax.device_get(self._assign_levels(boxes))).astype(np.int64)

        G = self.group_size if self.group_size is not None else max(1, -(-128 // P))
        vmem_cap = _vmem_capacity_bytes()
        feat_budget = vmem_cap // 8
        vmem_limit = min((vmem_cap * 3) // 4, 96 * 1024 * 1024)

        for lvl in range(num_levels):
            sel = np.nonzero(levels_np == lvl)[0]
            if sel.size == 0:
                continue
            imgs = batch_np[sel]
            order = np.argsort(imgs, kind="stable")
            sel = sel[order]
            imgs = imgs[order]

            # Bucket this level's boxes into groups of G sharing one image
            # (pad with zero-weight dummy slots at image boundaries).
            slot_box, src_group = [], []
            for img in np.unique(imgs):
                idxs = sel[imgs == img]
                ng = -(-idxs.size // G)
                padded = np.full((ng * G,), -1, dtype=np.int64)
                padded[:idxs.size] = idxs
                slot_box.append(padded)
                src_group.extend([int(img)] * ng)
            slot_box = np.concatenate(slot_box)
            src_group = jnp.asarray(np.asarray(src_group, dtype=np.int32))
            n_groups = int(src_group.shape[0])
            Mp = n_groups * G
            real_pos = np.nonzero(slot_box >= 0)[0]

            H_l, W_l = int(x[lvl].shape[2]), int(x[lvl].shape[3])
            wy_real, wx_real = _roi_align_weight_mats(
                boxes[sel], self.scales[lvl], P, self.sampling_ratio,
                H_l, W_l, self.aligned, H_l, W_l)          # (n, P, H_l), (n, P, W_l)
            wy_slots = jnp.zeros((Mp, P, H_l), jnp.float32).at[real_pos].set(wy_real)
            wx_slots = jnp.zeros((Mp, P, W_l), jnp.float32).at[real_pos].set(wx_real)
            wy_g = wy_slots.reshape(n_groups, G, P, H_l)
            # grouped, pre-transposed RHS: wx_g[g, w, j*P + q] = wx(slot j of group g)[q, w]
            wx_g = (wx_slots.reshape(n_groups, G, P, W_l)
                    .transpose(0, 3, 1, 2).reshape(n_groups, W_l, G * P))

            # (N, C, H_l, W_l) -> (N, C*H_l, W_l): contiguous merge, no padded HBM copy.
            feat2d = x[lvl].reshape(N, C * H_l, W_l)
            if self.compute_dtype is not None:
                feat2d = feat2d.astype(self.compute_dtype)
                wy_g = wy_g.astype(self.compute_dtype)
                wx_g = wx_g.astype(self.compute_dtype)

            res = _roi_align_level(feat2d, wy_g, wx_g, src_group,
                                   num_channels=C, out_dtype=out_dtype,
                                   channel_block=self.channel_block,
                                   feat_budget_bytes=feat_budget,
                                   vmem_limit_bytes=vmem_limit)      # (Mp, C, P, P)
            out = out.at[sel].set(res[real_pos])
        return out


# ---------------------------- pure-JAX reference -------------------------------

def _reference(pooler, x, box_lists):
    batch_idx = jnp.concatenate([
        jnp.full((b.shape[0],), i, dtype=jnp.int32)
        for i, b in enumerate(box_lists)])
    boxes = jnp.concatenate(box_lists, axis=0).astype(jnp.float32)
    M = boxes.shape[0]
    C = x[0].shape[1]
    P = pooler.output_size[0]
    if len(pooler.scales) == 1:
        levels = jnp.zeros((M,), jnp.int32)
    else:
        levels = pooler._assign_levels(boxes)
    out = jnp.zeros((M, C, P, P), jnp.float32)
    for level, (feat, scale) in enumerate(zip(x, pooler.scales)):
        H, W = feat.shape[2], feat.shape[3]
        wy, wx = _roi_align_weight_mats(boxes, scale, P, pooler.sampling_ratio,
                                        H, W, pooler.aligned, H, W)
        wy = wy * (levels == level).astype(jnp.float32)[:, None, None]
        fb = feat[batch_idx]
        out = out + jnp.einsum('mph,mchw,mqw->mcpq', wy, fb, wx)
    return out


# ----------------------------------- main --------------------------------------

if __name__ == "__main__":
    key = jax.random.PRNGKey(0)
    keys = jax.random.split(key, 8)

    N, C = 2, 4
    scales = [1.0 / 4, 1.0 / 8, 1.0 / 16, 1.0 / 32]       # levels 2..5
    sizes = [(16, 16), (8, 8), (4, 4), (2, 2)]            # per-level feature spatial sizes
    feats = [jax.random.normal(keys[i], (N, C, h, w), dtype=jnp.float32)
             for i, (h, w) in enumerate(sizes)]

    def make_boxes(k, n):
        k1, k2 = jax.random.split(k)
        xy0 = jax.random.uniform(k1, (n, 2), minval=0.0, maxval=36.0)
        wh = jax.random.uniform(k2, (n, 2), minval=4.0, maxval=28.0)
        xy1 = jnp.minimum(xy0 + wh, 64.0)
        return jnp.concatenate([xy0, xy1], axis=1)         # (n, 4)  x0, y0, x1, y1

    box_lists = [make_boxes(keys[4], 3), make_boxes(keys[5], 3)]   # M = 6 total

    pooler = ROIPoolerPallas(output_size=4, scales=scales, sampling_ratio=2,
                             pooler_type="ROIAlignV2",
                             canonical_box_size=16, canonical_level=4)
    out = jax.block_until_ready(pooler(feats, box_lists))

    ref = jax.block_until_ready(_reference(pooler, feats, box_lists))
    assert out.shape == (6, C, 4, 4), out.shape
    assert jnp.allclose(out, ref, atol=1e-2, rtol=1e-2), \
        float(jnp.max(jnp.abs(out - ref)))

    # Also exercise channel tiling (ncb = C//tc grid axis) and small explicit groups.
    pooler_tiled = ROIPoolerPallas(output_size=4, scales=scales, sampling_ratio=2,
                                   pooler_type="ROIAlignV2",
                                   canonical_box_size=16, canonical_level=4,
                                   channel_block=2, group_size=2)
    out_t = jax.block_until_ready(pooler_tiled(feats, box_lists))
    assert jnp.allclose(out_t, ref, atol=1e-2, rtol=1e-2), \
        float(jnp.max(jnp.abs(out_t - ref)))

    print("KERNEL_OK")
</pallas_src>

<mosaic_0001>
module attributes {stable_mosaic.version = 11 : i64} {
  func.func @_roi_align_group_kernel(%arg0: i32, %arg1: i32, %arg2: memref<1xi32, #tpu.memory_space<smem>>, %arg3: memref<1x32x4x16xf32, #tpu.memory_space<vmem>>, %arg4: memref<1x16x128xf32, #tpu.memory_space<vmem>>, %arg5: memref<1x64x16xf32, #tpu.memory_space<vmem>>, %arg6: memref<1x1x128x16xf32, #tpu.memory_space<vmem>>) attributes {dimension_semantics = [#tpu.dimension_semantics<parallel>, #tpu.dimension_semantics<parallel>], iteration_bounds = array<i64: 1, 1>, scalar_prefetch = 1 : i64, scratch_operands = 0 : i64, tpu.core_type = #tpu.core_type<tc>, window_params = [{transform_indices = @transform_0, window_bounds = array<i64: 1, 32, 4, 16>}, {transform_indices = @transform_1, window_bounds = array<i64: 1, 16, 128>}, {transform_indices = @transform_2, window_bounds = array<i64: 1, 64, 16>}, {transform_indices = @transform_3, window_bounds = array<i64: 1, 1, 128, 16>}]} {
    %c0 = arith.constant 0 : index
    %c0_0 = arith.constant 0 : index
    %c0_1 = arith.constant 0 : index
    %c0_2 = arith.constant 0 : index
    %0 = vector.load %arg3[%c0, %c0_0, %c0_1, %c0_2] : memref<1x32x4x16xf32, #tpu.memory_space<vmem>>, vector<1x32x4x16xf32>
    %1 = vector.shape_cast %0 : vector<1x32x4x16xf32> to vector<32x4x16xf32>
    %c0_3 = arith.constant 0 : index
    %c0_4 = arith.constant 0 : index
    %c0_5 = arith.constant 0 : index
    %2 = vector.load %arg4[%c0_3, %c0_4, %c0_5] : memref<1x16x128xf32, #tpu.memory_space<vmem>>, vector<1x16x128xf32>
    %3 = vector.shape_cast %2 : vector<1x16x128xf32> to vector<16x128xf32>
    %c0_6 = arith.constant 0 : index
    %c0_7 = arith.constant 0 : index
    %c0_8 = arith.constant 0 : index
    %4 = vector.load %arg5[%c0_6, %c0_7, %c0_8] : memref<1x64x16xf32, #tpu.memory_space<vmem>>, vector<1x64x16xf32>
    %5 = vector.shape_cast %4 : vector<1x64x16xf32> to vector<64x16xf32>
    %cst = arith.constant dense<0.000000e+00> : vector<64x128xf32>
    %6 = tpu.matmul %5, %3, %cst {dimension_numbers = #tpu.dot_dimension_numbers<[1], [0], [0], [1], [0, 0, 1, 1], [], []>} : vector<64x16xf32>, vector<16x128xf32>, vector<64x128xf32> -> vector<64x128xf32>
    %7 = vector.extract_strided_slice %6 {offsets = [0, 0], sizes = [64, 4], strides = [1, 1]} : vector<64x128xf32> to vector<64x4xf32>
    %8 = vector.extract_strided_slice %7 {offsets = [0, 0], sizes = [16, 4], strides = [1, 1]} : vector<64x4xf32> to vector<16x4xf32>
    %9 = vector.extract_strided_slice %7 {offsets = [16, 0], sizes = [16, 4], strides = [1, 1]} : vector<64x4xf32> to vector<16x4xf32>
    %10 = vector.extract_strided_slice %7 {offsets = [32, 0], sizes = [16, 4], strides = [1, 1]} : vector<64x4xf32> to vector<16x4xf32>
    %11 = vector.extract_strided_slice %7 {offsets = [48, 0], sizes = [16, 4], strides = [1, 1]} : vector<64x4xf32> to vector<16x4xf32>
    %12 = tpu.concatenate %8, %9, %10, %11 in 1 : vector<16x4xf32>, vector<16x4xf32>, vector<16x4xf32>, vector<16x4xf32> -> vector<16x16xf32>
    %13 = vector.extract_strided_slice %1 {offsets = [0, 0, 0], sizes = [1, 4, 16], strides = [1, 1, 1]} : vector<32x4x16xf32> to vector<1x4x16xf32>
    %14 = vector.shape_cast %13 : vector<1x4x16xf32> to vector<4x16xf32>
    %cst_9 = arith.constant dense<0.000000e+00> : vector<4x16xf32>
    %15 = tpu.matmul %14, %12, %cst_9 {dimension_numbers = #tpu.dot_dimension_numbers<[1], [0], [0], [1], [0, 0, 1, 1], [], []>} : vector<4x16xf32>, vector<16x16xf32>, vector<4x16xf32> -> vector<4x16xf32>
    %c0_10 = arith.constant 0 : index
    %c0_11 = arith.constant 0 : index
    %c0_12 = arith.constant 0 : index
    %c0_13 = arith.constant 0 : index
    %16 = vector.load %arg6[%c0_10, %c0_11, %c0_12, %c0_13] : memref<1x1x128x16xf32, #tpu.memory_space<vmem>>, vector<1x1x4x16xf32>
    %17 = vector.shape_cast %16 : vector<1x1x4x16xf32> to vector<4x16xf32>
    %18 = vector.shape_cast %15 : vector<4x16xf32> to vector<1x1x4x16xf32>
    tpu.vector_store %arg6[%c0_10, %c0_11, %c0_12, %c0_13], %18 {strides = array<i32>} : memref<1x1x128x16xf32, #tpu.memory_space<vmem>>, vector<1x1x4x16xf32>,
    %19 = vector.extract_strided_slice %6 {offsets = [0, 4], sizes = [64, 4], strides = [1, 1]} : vector<64x128xf32> to vector<64x4xf32>
    %20 = vector.extract_strided_slice %19 {offsets = [0, 0], sizes = [16, 4], strides = [1, 1]} : vector<64x4xf32> to vector<16x4xf32>
    %21 = vector.extract_strided_slice %19 {offsets = [16, 0], sizes = [16, 4], strides = [1, 1]} : vector<64x4xf32> to vector<16x4xf32>
    %22 = vector.extract_strided_slice %19 {offsets = [32, 0], sizes = [16, 4], strides = [1, 1]} : vector<64x4xf32> to vector<16x4xf32>
    %23 = vector.extract_strided_slice %19 {offsets = [48, 0], sizes = [16, 4], strides = [1, 1]} : vector<64x4xf32> to vector<16x4xf32>
    %24 = tpu.concatenate %20, %21, %22, %23 in 1 : vector<16x4xf32>, vector<16x4xf32>, vector<16x4xf32>, vector<16x4xf32> -> vector<16x16xf32>
    %25 = vector.extract_strided_slice %1 {offsets = [1, 0, 0], sizes = [1, 4, 16], strides = [1, 1, 1]} : vector<32x4x16xf32> to vector<1x4x16xf32>
    %26 = vector.shape_cast %25 : vector<1x4x16xf32> to vector<4x16xf32>
    %cst_14 = arith.constant dense<0.000000e+00> : vector<4x16xf32>
    %27 = tpu.matmul %26, %24, %cst_14 {dimension_numbers = #tpu.dot_dimension_numbers<[1], [0], [0], [1], [0, 0, 1, 1], [], []>} : vector<4x16xf32>, vector<16x16xf32>, vector<4x16xf32> -> vector<4x16xf32>
    %c0_15 = arith.constant 0 : index
    %c0_16 = arith.constant 0 : index
    %c4 = arith.constant 4 : index
    %c0_17 = arith.constant 0 : index
    %28 = vector.load %arg6[%c0_15, %c0_16, %c4, %c0_17] : memref<1x1x128x16xf32, #tpu.memory_space<vmem>>, vector<1x1x4x16xf32>
    %29 = vector.shape_cast %28 : vector<1x1x4x16xf32> to vector<4x16xf32>
    %30 = vector.shape_cast %27 : vector<4x16xf32> to vector<1x1x4x16xf32>
    tpu.vector_store %arg6[%c0_15, %c0_16, %c4, %c0_17], %30 {strides = array<i32>} : memref<1x1x128x16xf32, #tpu.memory_space<vmem>>, vector<1x1x4x16xf32>,
    %31 = vector.extract_strided_slice %6 {offsets = [0, 8], sizes = [64, 4], strides = [1, 1]} : vector<64x128xf32> to vector<64x4xf32>
    %32 = vector.extract_strided_slice %31 {offsets = [0, 0], sizes = [16, 4], strides = [1, 1]} : vector<64x4xf32> to vector<16x4xf32>
    %33 = vector.extract_strided_slice %31 {offsets = [16, 0], sizes = [16, 4], strides = [1, 1]} : vector<64x4xf32> to vector<16x4xf32>
    %34 = vector.extract_strided_slice %31 {offsets = [32, 0], sizes = [16, 4], strides = [1, 1]} : vector<64x4xf32> to vector<16x4xf32>
    %35 = vector.extract_strided_slice %31 {offsets = [48, 0], sizes = [16, 4], strides = [1, 1]} : vector<64x4xf32> to vector<16x4xf32>
    %36 = tpu.concatenate %32, %33, %34, %35 in 1 : vector<16x4xf32>, vector<16x4xf32>, vector<16x4xf32>, vector<16x4xf32> -> vector<16x16xf32>
    %37 = vector.extract_strided_slice %1 {offsets = [2, 0, 0], sizes = [1, 4, 16], strides = [1, 1, 1]} : vector<32x4x16xf32> to vector<1x4x16xf32>
    %38 = vector.shape_cast %37 : vector<1x4x16xf32> to vector<4x16xf32>
    %cst_18 = arith.constant dense<0.000000e+00> : vector<4x16xf32>
    %39 = tpu.matmul %38, %36, %cst_18 {dimension_numbers = #tpu.dot_dimension_numbers<[1], [0], [0], [1], [0, 0, 1, 1], [], []>} : vector<4x16xf32>, vector<16x16xf32>, vector<4x16xf32> -> vector<4x16xf32>
    %c0_19 = arith.constant 0 : index
    %c0_20 = arith.constant 0 : index
    %c8 = arith.constant 8 : index
    %c0_21 = arith.constant 0 : index
    %40 = vector.load %arg6[%c0_19, %c0_20, %c8, %c0_21] : memref<1x1x128x16xf32, #tpu.memory_space<vmem>>, vector<1x1x4x16xf32>
    %41 = vector.shape_cast %40 : vector<1x1x4x16xf32> to vector<4x16xf32>
    %42 = vector.shape_cast %39 : vector<4x16xf32> to vector<1x1x4x16xf32>
    tpu.vector_store %arg6[%c0_19, %c0_20, %c8, %c0_21], %42 {strides = array<i32>} : memref<1x1x128x16xf32, #tpu.memory_space<vmem>>, vector<1x1x4x16xf32>,
    %43 = vector.extract_strided_slice %6 {offsets = [0, 12], sizes = [64, 4], strides = [1, 1]} : vector<64x128xf32> to vector<64x4xf32>
    %44 = vector.extract_strided_slice %43 {offsets = [0, 0], sizes = [16, 4], strides = [1, 1]} : vector<64x4xf32> to vector<16x4xf32>
    %45 = vector.extract_strided_slice %43 {offsets = [16, 0], sizes = [16, 4], strides = [1, 1]} : vector<64x4xf32> to vector<16x4xf32>
    %46 = vector.extract_strided_slice %43 {offsets = [32, 0], sizes = [16, 4], strides = [1, 1]} : vector<64x4xf32> to vector<16x4xf32>
    %47 = vector.extract_strided_slice %43 {offsets = [48, 0], sizes = [16, 4], strides = [1, 1]} : vector<64x4xf32> to vector<16x4xf32>
    %48 = tpu.concatenate %44, %45, %46, %47 in 1 : vector<16x4xf32>, vector<16x4xf32>, vector<16x4xf32>, vector<16x4xf32> -> vector<16x16xf32>
    %49 = vector.extract_strided_slice %1 {offsets = [3, 0, 0], sizes = [1, 4, 16], strides = [1, 1, 1]} : vector<32x4x16xf32> to vector<1x4x16xf32>
    %50 = vector.shape_cast %49 : vector<1x4x16xf32> to vector<4x16xf32>
    %cst_22 = arith.constant dense<0.000000e+00> : vector<4x16xf32>
    %51 = tpu.matmul %50, %48, %cst_22 {dimension_numbers = #tpu.dot_dimension_numbers<[1], [0], [0], [1], [0, 0, 1, 1], [], []>} : vector<4x16xf32>, vector<16x16xf32>, vector<4x16xf32> -> vector<4x16xf32>
    %c0_23 = arith.constant 0 : index
    %c0_24 = arith.constant 0 : index
    %c12 = arith.constant 12 : index
    %c0_25 = arith.constant 0 : index
    %52 = vector.load %arg6[%c0_23, %c0_24, %c12, %c0_25] : memref<1x1x128x16xf32, #tpu.memory_space<vmem>>, vector<1x1x4x16xf32>
    %53 = vector.shape_cast %52 : vector<1x1x4x16xf32> to vector<4x16xf32>
    %54 = vector.shape_cast %51 : vector<4x16xf32> to vector<1x1x4x16xf32>
    tpu.vector_store %arg6[%c0_23, %c0_24, %c12, %c0_25], %54 {strides = array<i32>} : memref<1x1x128x16xf32, #tpu.memory_space<vmem>>, vector<1x1x4x16xf32>,
    %55 = vector.extract_strided_slice %6 {offsets = [0, 16], sizes = [64, 4], strides = [1, 1]} : vector<64x128xf32> to vector<64x4xf32>
    %56 = vector.extract_strided_slice %55 {offsets = [0, 0], sizes = [16, 4], strides = [1, 1]} : vector<64x4xf32> to vector<16x4xf32>
    %57 = vector.extract_strided_slice %55 {offsets = [16, 0], sizes = [16, 4], strides = [1, 1]} : vector<64x4xf32> to vector<16x4xf32>
    %58 = vector.extract_strided_slice %55 {offsets = [32, 0], sizes = [16, 4], strides = [1, 1]} : vector<64x4xf32> to vector<16x4xf32>
    %59 = vector.extract_strided_slice %55 {offsets = [48, 0], sizes = [16, 4], strides = [1, 1]} : vector<64x4xf32> to vector<16x4xf32>
    %60 = tpu.concatenate %56, %57, %58, %59 in 1 : vector<16x4xf32>, vector<16x4xf32>, vector<16x4xf32>, vector<16x4xf32> -> vector<16x16xf32>
    %61 = vector.extract_strided_slice %1 {offsets = [4, 0, 0], sizes = [1, 4, 16], strides = [1, 1, 1]} : vector<32x4x16xf32> to vector<1x4x16xf32>
    %62 = vector.shape_cast %61 : vector<1x4x16xf32> to vector<4x16xf32>
    %cst_26 = arith.constant dense<0.000000e+00> : vector<4x16xf32>
    %63 = tpu.matmul %62, %60, %cst_26 {dimension_numbers = #tpu.dot_dimension_numbers<[1], [0], [0], [1], [0, 0, 1, 1], [], []>} : vector<4x16xf32>, vector<16x16xf32>, vector<4x16xf32> -> vector<4x16xf32>
    %c0_27 = arith.constant 0 : index
    %c0_28 = arith.constant 0 : index
    %c16 = arith.constant 16 : index
    %c0_29 = arith.constant 0 : index
    %64 = vector.load %arg6[%c0_27, %c0_28, %c16, %c0_29] : memref<1x1x128x16xf32, #tpu.memory_space<vmem>>, vector<1x1x4x16xf32>
    %65 = vector.shape_cast %64 : vector<1x1x4x16xf32> to vector<4x16xf32>
    %66 = vector.shape_cast %63 : vector<4x16xf32> to vector<1x1x4x16xf32>
    tpu.vector_store %arg6[%c0_27, %c0_28, %c16, %c0_29], %66 {strides = array<i32>} : memref<1x1x128x16xf32, #tpu.memory_space<vmem>>, vector<1x1x4x16xf32>,
    %67 = vector.extract_strided_slice %6 {offsets = [0, 20], sizes = [64, 4], strides = [1, 1]} : vector<64x128xf32> to vector<64x4xf32>
    %68 = vector.extract_strided_slice %67 {offsets = [0, 0], sizes = [16, 4], strides = [1, 1]} : vector<64x4xf32> to vector<16x4xf32>
    %69 = vector.extract_strided_slice %67 {offsets = [16, 0], sizes = [16, 4], strides = [1, 1]} : vector<64x4xf32> to vector<16x4xf32>
    %70 = vector.extract_strided_slice %67 {offsets = [32, 0], sizes = [16, 4], strides = [1, 1]} : vector<64x4xf32> to vector<16x4xf32>
    %71 = vector.extract_strided_slice %67 {offsets = [48, 0], sizes = [16, 4], strides = [1, 1]} : vector<64x4xf32> to vector<16x4xf32>
    %72 = tpu.concatenate %68, %69, %70, %71 in 1 : vector<16x4xf32>, vector<16x4xf32>, vector<16x4xf32>, vector<16x4xf32> -> vector<16x16xf32>
    %73 = vector.extract_strided_slice %1 {offsets = [5, 0, 0], sizes = [1, 4, 16], strides = [1, 1, 1]} : vector<32x4x16xf32> to vector<1x4x16xf32>
    %74 = vector.shape_cast %73 : vector<1x4x16xf32> to vector<4x16xf32>
    %cst_30 = arith.constant dense<0.000000e+00> : vector<4x16xf32>
    %75 = tpu.matmul %74, %72, %cst_30 {dimension_numbers = #tpu.dot_dimension_numbers<[1], [0], [0], [1], [0, 0, 1, 1], [], []>} : vector<4x16xf32>, vector<16x16xf32>, vector<4x16xf32> -> vector<4x16xf32>
    %c0_31 = arith.constant 0 : index
    %c0_32 = arith.constant 0 : index
    %c20 = arith.constant 20 : index
    %c0_33 = arith.constant 0 : index
    %76 = vector.load %arg6[%c0_31, %c0_32, %c20, %c0_33] : memref<1x1x128x16xf32, #tpu.memory_space<vmem>>, vector<1x1x4x16xf32>
    %77 = vector.shape_cast %76 : vector<1x1x4x16xf32> to vector<4x16xf32>
    %78 = vector.shape_cast %75 : vector<4x16xf32> to vector<1x1x4x16xf32>
    tpu.vector_store %arg6[%c0_31, %c0_32, %c20, %c0_33], %78 {strides = array<i32>} : memref<1x1x128x16xf32, #tpu.memory_space<vmem>>, vector<1x1x4x16xf32>,
    %79 = vector.extract_strided_slice %6 {offsets = [0, 24], sizes = [64, 4], strides = [1, 1]} : vector<64x128xf32> to vector<64x4xf32>
    %80 = vector.extract_strided_slice %79 {offsets = [0, 0], sizes = [16, 4], strides = [1, 1]} : vector<64x4xf32> to vector<16x4xf32>
    %81 = vector.extract_strided_slice %79 {offsets = [16, 0], sizes = [16, 4], strides = [1, 1]} : vector<64x4xf32> to vector<16x4xf32>
    %82 = vector.extract_strided_slice %79 {offsets = [32, 0], sizes = [16, 4], strides = [1, 1]} : vector<64x4xf32> to vector<16x4xf32>
    %83 = vector.extract_strided_slice %79 {offsets = [48, 0], sizes = [16, 4], strides = [1, 1]} : vector<64x4xf32> to vector<16x4xf32>
    %84 = tpu.concatenate %80, %81, %82, %83 in 1 : vector<16x4xf32>, vector<16x4xf32>, vector<16x4xf32>, vector<16x4xf32> -> vector<16x16xf32>
    %85 = vector.extract_strided_slice %1 {offsets = [6, 0, 0], sizes = [1, 4, 16], strides = [1, 1, 1]} : vector<32x4x16xf32> to vector<1x4x16xf32>
    %86 = vector.shape_cast %85 : vector<1x4x16xf32> to vector<4x16xf32>
    %cst_34 = arith.constant dense<0.000000e+00> : vector<4x16xf32>
    %87 = tpu.matmul %86, %84, %cst_34 {dimension_numbers = #tpu.dot_dimension_numbers<[1], [0], [0], [1], [0, 0, 1, 1], [], []>} : vector<4x16xf32>, vector<16x16xf32>, vector<4x16xf32> -> vector<4x16xf32>
    %c0_35 = arith.constant 0 : index
    %c0_36 = arith.constant 0 : index
    %c24 = arith.constant 24 : index
    %c0_37 = arith.constant 0 : index
    %88 = vector.load %arg6[%c0_35, %c0_36, %c24, %c0_37] : memref<1x1x128x16xf32, #tpu.memory_space<vmem>>, vector<1x1x4x16xf32>
    %89 = vector.shape_cast %88 : vector<1x1x4x16xf32> to vector<4x16xf32>
    %90 = vector.shape_cast %87 : vector<4x16xf32> to vector<1x1x4x16xf32>
    tpu.vector_store %arg6[%c0_35, %c0_36, %c24, %c0_37], %90 {strides = array<i32>} : memref<1x1x128x16xf32, #tpu.memory_space<vmem>>, vector<1x1x4x16xf32>,
    %91 = vector.extract_strided_slice %6 {offsets = [0, 28], sizes = [64, 4], strides = [1, 1]} : vector<64x128xf32> to vector<64x4xf32>
    %92 = vector.extract_strided_slice %91 {offsets = [0, 0], sizes = [16, 4], strides = [1, 1]} : vector<64x4xf32> to vector<16x4xf32>
    %93 = vector.extract_strided_slice %91 {offsets = [16, 0], sizes = [16, 4], strides = [1, 1]} : vector<64x4xf32> to vector<16x4xf32>
    %94 = vector.extract_strided_slice %91 {offsets = [32, 0], sizes = [16, 4], strides = [1, 1]} : vector<64x4xf32> to vector<16x4xf32>
    %95 = vector.extract_strided_slice %91 {offsets = [48, 0], sizes = [16, 4], strides = [1, 1]} : vector<64x4xf32> to vector<16x4xf32>
    %96 = tpu.concatenate %92, %93, %94, %95 in 1 : vector<16x4xf32>, vector<16x4xf32>, vector<16x4xf32>, vector<16x4xf32> -> vector<16x16xf32>
    %97 = vector.extract_strided_slice %1 {offsets = [7, 0, 0], sizes = [1, 4, 16], strides = [1, 1, 1]} : vector<32x4x16xf32> to vector<1x4x16xf32>
    %98 = vector.shape_cast %97 : vector<1x4x16xf32> to vector<4x16xf32>
    %cst_38 = arith.constant dense<0.000000e+00> : vector<4x16xf32>
    %99 = tpu.matmul %98, %96, %cst_38 {dimension_numbers = #tpu.dot_dimension_numbers<[1], [0], [0], [1], [0, 0, 1, 1], [], []>} : vector<4x16xf32>, vector<16x16xf32>, vector<4x16xf32> -> vector<4x16xf32>
    %c0_39 = arith.constant 0 : index
    %c0_40 = arith.constant 0 : index
    %c28 = arith.constant 28 : index
    %c0_41 = arith.constant 0 : index
    %100 = vector.load %arg6[%c0_39, %c0_40, %c28, %c0_41] : memref<1x1x128x16xf32, #tpu.memory_space<vmem>>, vector<1x1x4x16xf32>
    %101 = vector.shape_cast %100 : vector<1x1x4x16xf32> to vector<4x16xf32>
    %102 = vector.shape_cast %99 : vector<4x16xf32> to vector<1x1x4x16xf32>
    tpu.vector_store %arg6[%c0_39, %c0_40, %c28, %c0_41], %102 {strides = array<i32>} : memref<1x1x128x16xf32, #tpu.memory_space<vmem>>, vector<1x1x4x16xf32>,
    %103 = vector.extract_strided_slice %6 {offsets = [0, 32], sizes = [64, 4], strides = [1, 1]} : vector<64x128xf32> to vector<64x4xf32>
    %104 = vector.extract_strided_slice %103 {offsets = [0, 0], sizes = [16, 4], strides = [1, 1]} : vector<64x4xf32> to vector<16x4xf32>
    %105 = vector.extract_strided_slice %103 {offsets = [16, 0], sizes = [16, 4], strides = [1, 1]} : vector<64x4xf32> to vector<16x4xf32>
    %106 = vector.extract_strided_slice %103 {offsets = [32, 0], sizes = [16, 4], strides = [1, 1]} : vector<64x4xf32> to vector<16x4xf32>
    %107 = vector.extract_strided_slice %103 {offsets = [48, 0], sizes = [16, 4], strides = [1, 1]} : vector<64x4xf32> to vector<16x4xf32>
    %108 = tpu.concatenate %104, %105, %106, %107 in 1 : vector<16x4xf32>, vector<16x4xf32>, vector<16x4xf32>, vector<16x4xf32> -> vector<16x16xf32>
    %109 = vector.extract_strided_slice %1 {offsets = [8, 0, 0], sizes = [1, 4, 16], strides = [1, 1, 1]} : vector<32x4x16xf32> to vector<1x4x16xf32>
    %110 = vector.shape_cast %109 : vector<1x4x16xf32> to vector<4x16xf32>
    %cst_42 = arith.constant dense<0.000000e+00> : vector<4x16xf32>
    %111 = tpu.matmul %110, %108, %cst_42 {dimension_numbers = #tpu.dot_dimension_numbers<[1], [0], [0], [1], [0, 0, 1, 1], [], []>} : vector<4x16xf32>, vector<16x16xf32>, vector<4x16xf32> -> vector<4x16xf32>
    %c0_43 = arith.constant 0 : index
    %c0_44 = arith.constant 0 : index
    %c32 = arith.constant 32 : index
    %c0_45 = arith.constant 0 : index
    %112 = vector.load %arg6[%c0_43, %c0_44, %c32, %c0_45] : memref<1x1x128x16xf32, #tpu.memory_space<vmem>>, vector<1x1x4x16xf32>
    %113 = vector.shape_cast %112 : vector<1x1x4x16xf32> to vector<4x16xf32>
    %114 = vector.shape_cast %111 : vector<4x16xf32> to vector<1x1x4x16xf32>
    tpu.vector_store %arg6[%c0_43, %c0_44, %c32, %c0_45], %114 {strides = array<i32>} : memref<1x1x128x16xf32, #tpu.memory_space<vmem>>, vector<1x1x4x16xf32>,
    %115 = vector.extract_strided_slice %6 {offsets = [0, 36], sizes = [64, 4], strides = [1, 1]} : vector<64x128xf32> to vector<64x4xf32>
    %116 = vector.extract_strided_slice %115 {offsets = [0, 0], sizes = [16, 4], strides = [1, 1]} : vector<64x4xf32> to vector<16x4xf32>
    %117 = vector.extract_strided_slice %115 {offsets = [16, 0], sizes = [16, 4], strides = [1, 1]} : vector<64x4xf32> to vector<16x4xf32>
    %118 = vector.extract_strided_slice %115 {offsets = [32, 0], sizes = [16, 4], strides = [1, 1]} : vector<64x4xf32> to vector<16x4xf32>
    %119 = vector.extract_strided_slice %115 {offsets = [48, 0], sizes = [16, 4], strides = [1, 1]} : vector<64x4xf32> to vector<16x4xf32>
    %120 = tpu.concatenate %116, %117, %118, %119 in 1 : vector<16x4xf32>, vector<16x4xf32>, vector<16x4xf32>, vector<16x4xf32> -> vector<16x16xf32>
    %121 = vector.extract_strided_slice %1 {offsets = [9, 0, 0], sizes = [1, 4, 16], strides = [1, 1, 1]} : vector<32x4x16xf32> to vector<1x4x16xf32>
    %122 = vector.shape_cast %121 : vector<1x4x16xf32> to vector<4x16xf32>
    %cst_46 = arith.constant dense<0.000000e+00> : vector<4x16xf32>
    %123 = tpu.matmul %122, %120, %cst_46 {dimension_numbers = #tpu.dot_dimension_numbers<[1], [0], [0], [1], [0, 0, 1, 1], [], []>} : vector<4x16xf32>, vector<16x16xf32>, vector<4x16xf32> -> vector<4x16xf32>
    %c0_47 = arith.constant 0 : index
    %c0_48 = arith.constant 0 : index
    %c36 = arith.constant 36 : index
    %c0_49 = arith.constant 0 : index
    %124 = vector.load %arg6[%c0_47, %c0_48, %c36, %c0_49] : memref<1x1x128x16xf32, #tpu.memory_space<vmem>>, vector<1x1x4x16xf32>
    %125 = vector.shape_cast %124 : vector<1x1x4x16xf32> to vector<4x16xf32>
    %126 = vector.shape_cast %123 : vector<4x16xf32> to vector<1x1x4x16xf32>
    tpu.vector_store %arg6[%c0_47, %c0_48, %c36, %c0_49], %126 {strides = array<i32>} : memref<1x1x128x16xf32, #tpu.memory_space<vmem>>, vector<1x1x4x16xf32>,
    %127 = vector.extract_strided_slice %6 {offsets = [0, 40], sizes = [64, 4], strides = [1, 1]} : vector<64x128xf32> to vector<64x4xf32>
    %128 = vector.extract_strided_slice %127 {offsets = [0, 0], sizes = [16, 4], strides = [1, 1]} : vector<64x4xf32> to vector<16x4xf32>
    %129 = vector.extract_strided_slice %127 {offsets = [16, 0], sizes = [16, 4], strides = [1, 1]} : vector<64x4xf32> to vector<16x4xf32>
    %130 = vector.extract_strided_slice %127 {offsets = [32, 0], sizes = [16, 4], strides = [1, 1]} : vector<64x4xf32> to vector<16x4xf32>
    %131 = vector.extract_strided_slice %127 {offsets = [48, 0], sizes = [16, 4], strides = [1, 1]} : vector<64x4xf32> to vector<16x4xf32>
    %132 = tpu.concatenate %128, %129, %130, %131 in 1 : vector<16x4xf32>, vector<16x4xf32>, vector<16x4xf32>, vector<16x4xf32> -> vector<16x16xf32>
    %133 = vector.extract_strided_slice %1 {offsets = [10, 0, 0], sizes = [1, 4, 16], strides = [1, 1, 1]} : vector<32x4x16xf32> to vector<1x4x16xf32>
    %134 = vector.shape_cast %133 : vector<1x4x16xf32> to vector<4x16xf32>
    %cst_50 = arith.constant dense<0.000000e+00> : vector<4x16xf32>
    %135 = tpu.matmul %134, %132, %cst_50 {dimension_numbers = #tpu.dot_dimension_numbers<[1], [0], [0], [1], [0, 0, 1, 1], [], []>} : vector<4x16xf32>, vector<16x16xf32>, vector<4x16xf32> -> vector<4x16xf32>
    %c0_51 = arith.constant 0 : index
    %c0_52 = arith.constant 0 : index
    %c40 = arith.constant 40 : index
    %c0_53 = arith.constant 0 : index
    %136 = vector.load %arg6[%c0_51, %c0_52, %c40, %c0_53] : memref<1x1x128x16xf32, #tpu.memory_space<vmem>>, vector<1x1x4x16xf32>
    %137 = vector.shape_cast %136 : vector<1x1x4x16xf32> to vector<4x16xf32>
    %138 = vector.shape_cast %135 : vector<4x16xf32> to vector<1x1x4x16xf32>
    tpu.vector_store %arg6[%c0_51, %c0_52, %c40, %c0_53], %138 {strides = array<i32>} : memref<1x1x128x16xf32, #tpu.memory_space<vmem>>, vector<1x1x4x16xf32>,
    %139 = vector.extract_strided_slice %6 {offsets = [0, 44], sizes = [64, 4], strides = [1, 1]} : vector<64x128xf32> to vector<64x4xf32>
    %140 = vector.extract_strided_slice %139 {offsets = [0, 0], sizes = [16, 4], strides = [1, 1]} : vector<64x4xf32> to vector<16x4xf32>
    %141 = vector.extract_strided_slice %139 {offsets = [16, 0], sizes = [16, 4], strides = [1, 1]} : vector<64x4xf32> to vector<16x4xf32>
    %142 = vector.extract_strided_slice %139 {offsets = [32, 0], sizes = [16, 4], strides = [1, 1]} : vector<64x4xf32> to vector<16x4xf32>
    %143 = vector.extract_strided_slice %139 {offsets = [48, 0], sizes = [16, 4], strides = [1, 1]} : vector<64x4xf32> to vector<16x4xf32>
    %144 = tpu.concatenate %140, %141, %142, %143 in 1 : vector<16x4xf32>, vector<16x4xf32>, vector<16x4xf32>, vector<16x4xf32> -> vector<16x16xf32>
    %145 = vector.extract_strided_slice %1 {offsets = [11, 0, 0], sizes = [1, 4, 16], strides = [1, 1, 1]} : vector<32x4x16xf32> to vector<1x4x16xf32>
    %146 = vector.shape_cast %145 : vector<1x4x16xf32> to vector<4x16xf32>
    %cst_54 = arith.constant dense<0.000000e+00> : vector<4x16xf32>
    %147 = tpu.matmul %146, %144, %cst_54 {dimension_numbers = #tpu.dot_dimension_numbers<[1], [0], [0], [1], [0, 0, 1, 1], [], []>} : vector<4x16xf32>, vector<16x16xf32>, vector<4x16xf32> -> vector<4x16xf32>
    %c0_55 = arith.constant 0 : index
    %c0_56 = arith.constant 0 : index
    %c44 = arith.constant 44 : index
    %c0_57 = arith.constant 0 : index
    %148 = vector.load %arg6[%c0_55, %c0_56, %c44, %c0_57] : memref<1x1x128x16xf32, #tpu.memory_space<vmem>>, vector<1x1x4x16xf32>
    %149 = vector.shape_cast %148 : vector<1x1x4x16xf32> to vector<4x16xf32>
    %150 = vector.shape_cast %147 : vector<4x16xf32> to vector<1x1x4x16xf32>
    tpu.vector_store %arg6[%c0_55, %c0_56, %c44, %c0_57], %150 {strides = array<i32>} : memref<1x1x128x16xf32, #tpu.memory_space<vmem>>, vector<1x1x4x16xf32>,
    %151 = vector.extract_strided_slice %6 {offsets = [0, 48], sizes = [64, 4], strides = [1, 1]} : vector<64x128xf32> to vector<64x4xf32>
    %152 = vector.extract_strided_slice %151 {offsets = [0, 0], sizes = [16, 4], strides = [1, 1]} : vector<64x4xf32> to vector<16x4xf32>
    %153 = vector.extract_strided_slice %151 {offsets = [16, 0], sizes = [16, 4], strides = [1, 1]} : vector<64x4xf32> to vector<16x4xf32>
    %154 = vector.extract_strided_slice %151 {offsets = [32, 0], sizes = [16, 4], strides = [1, 1]} : vector<64x4xf32> to vector<16x4xf32>
    %155 = vector.extract_strided_slice %151 {offsets = [48, 0], sizes = [16, 4], strides = [1, 1]} : vector<64x4xf32> to vector<16x4xf32>
    %156 = tpu.concatenate %152, %153, %154, %155 in 1 : vector<16x4xf32>, vector<16x4xf32>, vector<16x4xf32>, vector<16x4xf32> -> vector<16x16xf32>
    %157 = vector.extract_strided_slice %1 {offsets = [12, 0, 0], sizes = [1, 4, 16], strides = [1, 1, 1]} : vector<32x4x16xf32> to vector<1x4x16xf32>
    %158 = vector.shape_cast %157 : vector<1x4x16xf32> to vector<4x16xf32>
    %cst_58 = arith.constant dense<0.000000e+00> : vector<4x16xf32>
    %159 = tpu.matmul %158, %156, %cst_58 {dimension_numbers = #tpu.dot_dimension_numbers<[1], [0], [0], [1], [0, 0, 1, 1], [], []>} : vector<4x16xf32>, vector<16x16xf32>, vector<4x16xf32> -> vector<4x16xf32>
    %c0_59 = arith.constant 0 : index
    %c0_60 = arith.constant 0 : index
    %c48 = arith.constant 48 : index
    %c0_61 = arith.constant 0 : index
    %160 = vector.load %arg6[%c0_59, %c0_60, %c48, %c0_61] : memref<1x1x128x16xf32, #tpu.memory_space<vmem>>, vector<1x1x4x16xf32>
    %161 = vector.shape_cast %160 : vector<1x1x4x16xf32> to vector<4x16xf32>
    %162 = vector.shape_cast %159 : vector<4x16xf32> to vector<1x1x4x16xf32>
    tpu.vector_store %arg6[%c0_59, %c0_60, %c48, %c0_61], %162 {strides = array<i32>} : memref<1x1x128x16xf32, #tpu.memory_space<vmem>>, vector<1x1x4x16xf32>,
    %163 = vector.extract_strided_slice %6 {offsets = [0, 52], sizes = [64, 4], strides = [1, 1]} : vector<64x128xf32> to vector<64x4xf32>
    %164 = vector.extract_strided_slice %163 {offsets = [0, 0], sizes = [16, 4], strides = [1, 1]} : vector<64x4xf32> to vector<16x4xf32>
    %165 = vector.extract_strided_slice %163 {offsets = [16, 0], sizes = [16, 4], strides = [1, 1]} : vector<64x4xf32> to vector<16x4xf32>
    %166 = vector.extract_strided_slice %163 {offsets = [32, 0], sizes = [16, 4], strides = [1, 1]} : vector<64x4xf32> to vector<16x4xf32>
    %167 = vector.extract_strided_slice %163 {offsets = [48, 0], sizes = [16, 4], strides = [1, 1]} : vector<64x4xf32> to vector<16x4xf32>
    %168 = tpu.concatenate %164, %165, %166, %167 in 1 : vector<16x4xf32>, vector<16x4xf32>, vector<16x4xf32>, vector<16x4xf32> -> vector<16x16xf32>
    %169 = vector.extract_strided_slice %1 {offsets = [13, 0, 0], sizes = [1, 4, 16], strides = [1, 1, 1]} : vector<32x4x16xf32> to vector<1x4x16xf32>
    %170 = vector.shape_cast %169 : vector<1x4x16xf32> to vector<4x16xf32>
    %cst_62 = arith.constant dense<0.000000e+00> : vector<4x16xf32>
    %171 = tpu.matmul %170, %168, %cst_62 {dimension_numbers = #tpu.dot_dimension_numbers<[1], [0], [0], [1], [0, 0, 1, 1], [], []>} : vector<4x16xf32>, vector<16x16xf32>, vector<4x16xf32> -> vector<4x16xf32>
    %c0_63 = arith.constant 0 : index
    %c0_64 = arith.constant 0 : index
    %c52 = arith.constant 52 : index
    %c0_65 = arith.constant 0 : index
    %172 = vector.load %arg6[%c0_63, %c0_64, %c52, %c0_65] : memref<1x1x128x16xf32, #tpu.memory_space<vmem>>, vector<1x1x4x16xf32>
    %173 = vector.shape_cast %172 : vector<1x1x4x16xf32> to vector<4x16xf32>
    %174 = vector.shape_cast %171 : vector<4x16xf32> to vector<1x1x4x16xf32>
    tpu.vector_store %arg6[%c0_63, %c0_64, %c52, %c0_65], %174 {strides = array<i32>} : memref<1x1x128x16xf32, #tpu.memory_space<vmem>>, vector<1x1x4x16xf32>,
    %175 = vector.extract_strided_slice %6 {offsets = [0, 56], sizes = [64, 4], strides = [1, 1]} : vector<64x128xf32> to vector<64x4xf32>
    %176 = vector.extract_strided_slice %175 {offsets = [0, 0], sizes = [16, 4], strides = [1, 1]} : vector<64x4xf32> to vector<16x4xf32>
    %177 = vector.extract_strided_slice %175 {offsets = [16, 0], sizes = [16, 4], strides = [1, 1]} : vector<64x4xf32> to vector<16x4xf32>
    %178 = vector.extract_strided_slice %175 {offsets = [32, 0], sizes = [16, 4], strides = [1, 1]} : vector<64x4xf32> to vector<16x4xf32>
    %179 = vector.extract_strided_slice %175 {offsets = [48, 0], sizes = [16, 4], strides = [1, 1]} : vector<64x4xf32> to vector<16x4xf32>
    %180 = tpu.concatenate %176, %177, %178, %179 in 1 : vector<16x4xf32>, vector<16x4xf32>, vector<16x4xf32>, vector<16x4xf32> -> vector<16x16xf32>
    %181 = vector.extract_strided_slice %1 {offsets = [14, 0, 0], sizes = [1, 4, 16], strides = [1, 1, 1]} : vector<32x4x16xf32> to vector<1x4x16xf32>
    %182 = vector.shape_cast %181 : vector<1x4x16xf32> to vector<4x16xf32>
    %cst_66 = arith.constant dense<0.000000e+00> : vector<4x16xf32>
    %183 = tpu.matmul %182, %180, %cst_66 {dimension_numbers = #tpu.dot_dimension_numbers<[1], [0], [0], [1], [0, 0, 1, 1], [], []>} : vector<4x16xf32>, vector<16x16xf32>, vector<4x16xf32> -> vector<4x16xf32>
    %c0_67 = arith.constant 0 : index
    %c0_68 = arith.constant 0 : index
    %c56 = arith.constant 56 : index
    %c0_69 = arith.constant 0 : index
    %184 = vector.load %arg6[%c0_67, %c0_68, %c56, %c0_69] : memref<1x1x128x16xf32, #tpu.memory_space<vmem>>, vector<1x1x4x16xf32>
    %185 = vector.shape_cast %184 : vector<1x1x4x16xf32> to vector<4x16xf32>
    %186 = vector.shape_cast %183 : vector<4x16xf32> to vector<1x1x4x16xf32>
    tpu.vector_store %arg6[%c0_67, %c0_68, %c56, %c0_69], %186 {strides = array<i32>} : memref<1x1x128x16xf32, #tpu.memory_space<vmem>>, vector<1x1x4x16xf32>,
    %187 = vector.extract_strided_slice %6 {offsets = [0, 60], sizes = [64, 4], strides = [1, 1]} : vector<64x128xf32> to vector<64x4xf32>
    %188 = vector.extract_strided_slice %187 {offsets = [0, 0], sizes = [16, 4], strides = [1, 1]} : vector<64x4xf32> to vector<16x4xf32>
    %189 = vector.extract_strided_slice %187 {offsets = [16, 0], sizes = [16, 4], strides = [1, 1]} : vector<64x4xf32> to vector<16x4xf32>
    %190 = vector.extract_strided_slice %187 {offsets = [32, 0], sizes = [16, 4], strides = [1, 1]} : vector<64x4xf32> to vector<16x4xf32>
    %191 = vector.extract_strided_slice %187 {offsets = [48, 0], sizes = [16, 4], strides = [1, 1]} : vector<64x4xf32> to vector<16x4xf32>
    %192 = tpu.concatenate %188, %189, %190, %191 in 1 : vector<16x4xf32>, vector<16x4xf32>, vector<16x4xf32>, vector<16x4xf32> -> vector<16x16xf32>
    %193 = vector.extract_strided_slice %1 {offsets = [15, 0, 0], sizes = [1, 4, 16], strides = [1, 1, 1]} : vector<32x4x16xf32> to vector<1x4x16xf32>
    %194 = vector.shape_cast %193 : vector<1x4x16xf32> to vector<4x16xf32>
    %cst_70 = arith.constant dense<0.000000e+00> : vector<4x16xf32>
    %195 = tpu.matmul %194, %192, %cst_70 {dimension_numbers = #tpu.dot_dimension_numbers<[1], [0], [0], [1], [0, 0, 1, 1], [], []>} : vector<4x16xf32>, vector<16x16xf32>, vector<4x16xf32> -> vector<4x16xf32>
    %c0_71 = arith.constant 0 : index
    %c0_72 = arith.constant 0 : index
    %c60 = arith.constant 60 : index
    %c0_73 = arith.constant 0 : index
    %196 = vector.load %arg6[%c0_71, %c0_72, %c60, %c0_73] : memref<1x1x128x16xf32, #tpu.memory_space<vmem>>, vector<1x1x4x16xf32>
    %197 = vector.shape_cast %196 : vector<1x1x4x16xf32> to vector<4x16xf32>
    %198 = vector.shape_cast %195 : vector<4x16xf32> to vector<1x1x4x16xf32>
    tpu.vector_store %arg6[%c0_71, %c0_72, %c60, %c0_73], %198 {strides = array<i32>} : memref<1x1x128x16xf32, #tpu.memory_space<vmem>>, vector<1x1x4x16xf32>,
    %199 = vector.extract_strided_slice %6 {offsets = [0, 64], sizes = [64, 4], strides = [1, 1]} : vector<64x128xf32> to vector<64x4xf32>
    %200 = vector.extract_strided_slice %199 {offsets = [0, 0], sizes = [16, 4], strides = [1, 1]} : vector<64x4xf32> to vector<16x4xf32>
    %201 = vector.extract_strided_slice %199 {offsets = [16, 0], sizes = [16, 4], strides = [1, 1]} : vector<64x4xf32> to vector<16x4xf32>
    %202 = vector.extract_strided_slice %199 {offsets = [32, 0], sizes = [16, 4], strides = [1, 1]} : vector<64x4xf32> to vector<16x4xf32>
    %203 = vector.extract_strided_slice %199 {offsets = [48, 0], sizes = [16, 4], strides = [1, 1]} : vector<64x4xf32> to vector<16x4xf32>
    %204 = tpu.concatenate %200, %201, %202, %203 in 1 : vector<16x4xf32>, vector<16x4xf32>, vector<16x4xf32>, vector<16x4xf32> -> vector<16x16xf32>
    %205 = vector.extract_strided_slice %1 {offsets = [16, 0, 0], sizes = [1, 4, 16], strides = [1, 1, 1]} : vector<32x4x16xf32> to vector<1x4x16xf32>
    %206 = vector.shape_cast %205 : vector<1x4x16xf32> to vector<4x16xf32>
    %cst_74 = arith.constant dense<0.000000e+00> : vector<4x16xf32>
    %207 = tpu.matmul %206, %204, %cst_74 {dimension_numbers = #tpu.dot_dimension_numbers<[1], [0], [0], [1], [0, 0, 1, 1], [], []>} : vector<4x16xf32>, vector<16x16xf32>, vector<4x16xf32> -> vector<4x16xf32>
    %c0_75 = arith.constant 0 : index
    %c0_76 = arith.constant 0 : index
    %c64 = arith.constant 64 : index
    %c0_77 = arith.constant 0 : index
    %208 = vector.load %arg6[%c0_75, %c0_76, %c64, %c0_77] : memref<1x1x128x16xf32, #tpu.memory_space<vmem>>, vector<1x1x4x16xf32>
    %209 = vector.shape_cast %208 : vector<1x1x4x16xf32> to vector<4x16xf32>
    %210 = vector.shape_cast %207 : vector<4x16xf32> to vector<1x1x4x16xf32>
    tpu.vector_store %arg6[%c0_75, %c0_76, %c64, %c0_77], %210 {strides = array<i32>} : memref<1x1x128x16xf32, #tpu.memory_space<vmem>>, vector<1x1x4x16xf32>,
    %211 = vector.extract_strided_slice %6 {offsets = [0, 68], sizes = [64, 4], strides = [1, 1]} : vector<64x128xf32> to vector<64x4xf32>
    %212 = vector.extract_strided_slice %211 {offsets = [0, 0], sizes = [16, 4], strides = [1, 1]} : vector<64x4xf32> to vector<16x4xf32>
    %213 = vector.extract_strided_slice %211 {offsets = [16, 0], sizes = [16, 4], strides = [1, 1]} : vector<64x4xf32> to vector<16x4xf32>
    %214 = vector.extract_strided_slice %211 {offsets = [32, 0], sizes = [16, 4], strides = [1, 1]} : vector<64x4xf32> to vector<16x4xf32>
    %215 = vector.extract_strided_slice %211 {offsets = [48, 0], sizes = [16, 4], strides = [1, 1]} : vector<64x4xf32> to vector<16x4xf32>
    %216 = tpu.concatenate %212, %213, %214, %215 in 1 : vector<16x4xf32>, vector<16x4xf32>, vector<16x4xf32>, vector<16x4xf32> -> vector<16x16xf32>
    %217 = vector.extract_strided_slice %1 {offsets = [17, 0, 0], sizes = [1, 4, 16], strides = [1, 1, 1]} : vector<32x4x16xf32> to vector<1x4x16xf32>
    %218 = vector.shape_cast %217 : vector<1x4x16xf32> to vector<4x16xf32>
    %cst_78 = arith.constant dense<0.000000e+00> : vector<4x16xf32>
    %219 = tpu.matmul %218, %216, %cst_78 {dimension_numbers = #tpu.dot_dimension_numbers<[1], [0], [0], [1], [0, 0, 1, 1], [], []>} : vector<4x16xf32>, vector<16x16xf32>, vector<4x16xf32> -> vector<4x16xf32>
    %c0_79 = arith.constant 0 : index
    %c0_80 = arith.constant 0 : index
    %c68 = arith.constant 68 : index
    %c0_81 = arith.constant 0 : index
    %220 = vector.load %arg6[%c0_79, %c0_80, %c68, %c0_81] : memref<1x1x128x16xf32, #tpu.memory_space<vmem>>, vector<1x1x4x16xf32>
    %221 = vector.shape_cast %220 : vector<1x1x4x16xf32> to vector<4x16xf32>
    %222 = vector.shape_cast %219 : vector<4x16xf32> to vector<1x1x4x16xf32>
    tpu.vector_store %arg6[%c0_79, %c0_80, %c68, %c0_81], %222 {strides = array<i32>} : memref<1x1x128x16xf32, #tpu.memory_space<vmem>>, vector<1x1x4x16xf32>,
    %223 = vector.extract_strided_slice %6 {offsets = [0, 72], sizes = [64, 4], strides = [1, 1]} : vector<64x128xf32> to vector<64x4xf32>
    %224 = vector.extract_strided_slice %223 {offsets = [0, 0], sizes = [16, 4], strides = [1, 1]} : vector<64x4xf32> to vector<16x4xf32>
    %225 = vector.extract_strided_slice %223 {offsets = [16, 0], sizes = [16, 4], strides = [1, 1]} : vector<64x4xf32> to vector<16x4xf32>
    %226 = vector.extract_strided_slice %223 {offsets = [32, 0], sizes = [16, 4], strides = [1, 1]} : vector<64x4xf32> to vector<16x4xf32>
    %227 = vector.extract_strided_slice %223 {offsets = [48, 0], sizes = [16, 4], strides = [1, 1]} : vector<64x4xf32> to vector<16x4xf32>
    %228 = tpu.concatenate %224, %225, %226, %227 in 1 : vector<16x4xf32>, vector<16x4xf32>, vector<16x4xf32>, vector<16x4xf32> -> vector<16x16xf32>
    %229 = vector.extract_strided_slice %1 {offsets = [18, 0, 0], sizes = [1, 4, 16], strides = [1, 1, 1]} : vector<32x4x16xf32> to vector<1x4x16xf32>
    %230 = vector.shape_cast %229 : vector<1x4x16xf32> to vector<4x16xf32>
    %cst_82 = arith.constant dense<0.000000e+00> : vector<4x16xf32>
    %231 = tpu.matmul %230, %228, %cst_82 {dimension_numbers = #tpu.dot_dimension_numbers<[1], [0], [0], [1], [0, 0, 1, 1], [], []>} : vector<4x16xf32>, vector<16x16xf32>, vector<4x16xf32> -> vector<4x16xf32>
    %c0_83 = arith.constant 0 : index
    %c0_84 = arith.constant 0 : index
    %c72 = arith.constant 72 : index
    %c0_85 = arith.constant 0 : index
    %232 = vector.load %arg6[%c0_83, %c0_84, %c72, %c0_85] : memref<1x1x128x16xf32, #tpu.memory_space<vmem>>, vector<1x1x4x16xf32>
    %233 = vector.shape_cast %232 : vector<1x1x4x16xf32> to vector<4x16xf32>
    %234 = vector.shape_cast %231 : vector<4x16xf32> to vector<1x1x4x16xf32>
    tpu.vector_store %arg6[%c0_83, %c0_84, %c72, %c0_85], %234 {strides = array<i32>} : memref<1x1x128x16xf32, #tpu.memory_space<vmem>>, vector<1x1x4x16xf32>,
    %235 = vector.extract_strided_slice %6 {offsets = [0, 76], sizes = [64, 4], strides = [1, 1]} : vector<64x128xf32> to vector<64x4xf32>
    %236 = vector.extract_strided_slice %235 {offsets = [0, 0], sizes = [16, 4], strides = [1, 1]} : vector<64x4xf32> to vector<16x4xf32>
    %237 = vector.extract_strided_slice %235 {offsets = [16, 0], sizes = [16, 4], strides = [1, 1]} : vector<64x4xf32> to vector<16x4xf32>
    %238 = vector.extract_strided_slice %235 {offsets = [32, 0], sizes = [16, 4], strides = [1, 1]} : vector<64x4xf32> to vector<16x4xf32>
    %239 = vector.extract_strided_slice %235 {offsets = [48, 0], sizes = [16, 4], strides = [1, 1]} : vector<64x4xf32> to vector<16x4xf32>
    %240 = tpu.concatenate %236, %237, %238, %239 in 1 : vector<16x4xf32>, vector<16x4xf32>, vector<16x4xf32>, vector<16x4xf32> -> vector<16x16xf32>
    %241 = vector.extract_strided_slice %1 {offsets = [19, 0, 0], sizes = [1, 4, 16], strides = [1, 1, 1]} : vector<32x4x16xf32> to vector<1x4x16xf32>
    %242 = vector.shape_cast %241 : vector<1x4x16xf32> to vector<4x16xf32>
    %cst_86 = arith.constant dense<0.000000e+00> : vector<4x16xf32>
    %243 = tpu.matmul %242, %240, %cst_86 {dimension_numbers = #tpu.dot_dimension_numbers<[1], [0], [0], [1], [0, 0, 1, 1], [], []>} : vector<4x16xf32>, vector<16x16xf32>, vector<4x16xf32> -> vector<4x16xf32>
    %c0_87 = arith.constant 0 : index
    %c0_88 = arith.constant 0 : index
    %c76 = arith.constant 76 : index
    %c0_89 = arith.constant 0 : index
    %244 = vector.load %arg6[%c0_87, %c0_88, %c76, %c0_89] : memref<1x1x128x16xf32, #tpu.memory_space<vmem>>, vector<1x1x4x16xf32>
    %245 = vector.shape_cast %244 : vector<1x1x4x16xf32> to vector<4x16xf32>
    %246 = vector.shape_cast %243 : vector<4x16xf32> to vector<1x1x4x16xf32>
    tpu.vector_store %arg6[%c0_87, %c0_88, %c76, %c0_89], %246 {strides = array<i32>} : memref<1x1x128x16xf32, #tpu.memory_space<vmem>>, vector<1x1x4x16xf32>,
    %247 = vector.extract_strided_slice %6 {offsets = [0, 80], sizes = [64, 4], strides = [1, 1]} : vector<64x128xf32> to vector<64x4xf32>
    %248 = vector.extract_strided_slice %247 {offsets = [0, 0], sizes = [16, 4], strides = [1, 1]} : vector<64x4xf32> to vector<16x4xf32>
    %249 = vector.extract_strided_slice %247 {offsets = [16, 0], sizes = [16, 4], strides = [1, 1]} : vector<64x4xf32> to vector<16x4xf32>
    %250 = vector.extract_strided_slice %247 {offsets = [32, 0], sizes = [16, 4], strides = [1, 1]} : vector<64x4xf32> to vector<16x4xf32>
    %251 = vector.extract_strided_slice %247 {offsets = [48, 0], sizes = [16, 4], strides = [1, 1]} : vector<64x4xf32> to vector<16x4xf32>
    %252 = tpu.concatenate %248, %249, %250, %251 in 1 : vector<16x4xf32>, vector<16x4xf32>, vector<16x4xf32>, vector<16x4xf32> -> vector<16x16xf32>
    %253 = vector.extract_strided_slice %1 {offsets = [20, 0, 0], sizes = [1, 4, 16], strides = [1, 1, 1]} : vector<32x4x16xf32> to vector<1x4x16xf32>
    %254 = vector.shape_cast %253 : vector<1x4x16xf32> to vector<4x16xf32>
    %cst_90 = arith.constant dense<0.000000e+00> : vector<4x16xf32>
    %255 = tpu.matmul %254, %252, %cst_90 {dimension_numbers = #tpu.dot_dimension_numbers<[1], [0], [0], [1], [0, 0, 1, 1], [], []>} : vector<4x16xf32>, vector<16x16xf32>, vector<4x16xf32> -> vector<4x16xf32>
    %c0_91 = arith.constant 0 : index
    %c0_92 = arith.constant 0 : index
    %c80 = arith.constant 80 : index
    %c0_93 = arith.constant 0 : index
    %256 = vector.load %arg6[%c0_91, %c0_92, %c80, %c0_93] : memref<1x1x128x16xf32, #tpu.memory_space<vmem>>, vector<1x1x4x16xf32>
    %257 = vector.shape_cast %256 : vector<1x1x4x16xf32> to vector<4x16xf32>
    %258 = vector.shape_cast %255 : vector<4x16xf32> to vector<1x1x4x16xf32>
    tpu.vector_store %arg6[%c0_91, %c0_92, %c80, %c0_93], %258 {strides = array<i32>} : memref<1x1x128x16xf32, #tpu.memory_space<vmem>>, vector<1x1x4x16xf32>,
    %259 = vector.extract_strided_slice %6 {offsets = [0, 84], sizes = [64, 4], strides = [1, 1]} : vector<64x128xf32> to vector<64x4xf32>
    %260 = vector.extract_strided_slice %259 {offsets = [0, 0], sizes = [16, 4], strides = [1, 1]} : vector<64x4xf32> to vector<16x4xf32>
    %261 = vector.extract_strided_slice %259 {offsets = [16, 0], sizes = [16, 4], strides = [1, 1]} : vector<64x4xf32> to vector<16x4xf32>
    %262 = vector.extract_strided_slice %259 {offsets = [32, 0], sizes = [16, 4], strides = [1, 1]} : vector<64x4xf32> to vector<16x4xf32>
    %263 = vector.extract_strided_slice %259 {offsets = [48, 0], sizes = [16, 4], strides = [1, 1]} : vector<64x4xf32> to vector<16x4xf32>
    %264 = tpu.concatenate %260, %261, %262, %263 in 1 : vector<16x4xf32>, vector<16x4xf32>, vector<16x4xf32>, vector<16x4xf32> -> vector<16x16xf32>
    %265 = vector.extract_strided_slice %1 {offsets = [21, 0, 0], sizes = [1, 4, 16], strides = [1, 1, 1]} : vector<32x4x16xf32> to vector<1x4x16xf32>
    %266 = vector.shape_cast %265 : vector<1x4x16xf32> to vector<4x16xf32>
    %cst_94 = arith.constant dense<0.000000e+00> : vector<4x16xf32>
    %267 = tpu.matmul %266, %264, %cst_94 {dimension_numbers = #tpu.dot_dimension_numbers<[1], [0], [0], [1], [0, 0, 1, 1], [], []>} : vector<4x16xf32>, vector<16x16xf32>, vector<4x16xf32> -> vector<4x16xf32>
    %c0_95 = arith.constant 0 : index
    %c0_96 = arith.constant 0 : index
    %c84 = arith.constant 84 : index
    %c0_97 = arith.constant 0 : index
    %268 = vector.load %arg6[%c0_95, %c0_96, %c84, %c0_97] : memref<1x1x128x16xf32, #tpu.memory_space<vmem>>, vector<1x1x4x16xf32>
    %269 = vector.shape_cast %268 : vector<1x1x4x16xf32> to vector<4x16xf32>
    %270 = vector.shape_cast %267 : vector<4x16xf32> to vector<1x1x4x16xf32>
    tpu.vector_store %arg6[%c0_95, %c0_96, %c84, %c0_97], %270 {strides = array<i32>} : memref<1x1x128x16xf32, #tpu.memory_space<vmem>>, vector<1x1x4x16xf32>,
    %271 = vector.extract_strided_slice %6 {offsets = [0, 88], sizes = [64, 4], strides = [1, 1]} : vector<64x128xf32> to vector<64x4xf32>
    %272 = vector.extract_strided_slice %271 {offsets = [0, 0], sizes = [16, 4], strides = [1, 1]} : vector<64x4xf32> to vector<16x4xf32>
    %273 = vector.extract_strided_slice %271 {offsets = [16, 0], sizes = [16, 4], strides = [1, 1]} : vector<64x4xf32> to vector<16x4xf32>
    %274 = vector.extract_strided_slice %271 {offsets = [32, 0], sizes = [16, 4], strides = [1, 1]} : vector<64x4xf32> to vector<16x4xf32>
    %275 = vector.extract_strided_slice %271 {offsets = [48, 0], sizes = [16, 4], strides = [1, 1]} : vector<64x4xf32> to vector<16x4xf32>
    %276 = tpu.concatenate %272, %273, %274, %275 in 1 : vector<16x4xf32>, vector<16x4xf32>, vector<16x4xf32>, vector<16x4xf32> -> vector<16x16xf32>
    %277 = vector.extract_strided_slice %1 {offsets = [22, 0, 0], sizes = [1, 4, 16], strides = [1, 1, 1]} : vector<32x4x16xf32> to vector<1x4x16xf32>
    %278 = vector.shape_cast %277 : vector<1x4x16xf32> to vector<4x16xf32>
    %cst_98 = arith.constant dense<0.000000e+00> : vector<4x16xf32>
    %279 = tpu.matmul %278, %276, %cst_98 {dimension_numbers = #tpu.dot_dimension_numbers<[1], [0], [0], [1], [0, 0, 1, 1], [], []>} : vector<4x16xf32>, vector<16x16xf32>, vector<4x16xf32> -> vector<4x16xf32>
    %c0_99 = arith.constant 0 : index
    %c0_100 = arith.constant 0 : index
    %c88 = arith.constant 88 : index
    %c0_101 = arith.constant 0 : index
    %280 = vector.load %arg6[%c0_99, %c0_100, %c88, %c0_101] : memref<1x1x128x16xf32, #tpu.memory_space<vmem>>, vector<1x1x4x16xf32>
    %281 = vector.shape_cast %280 : vector<1x1x4x16xf32> to vector<4x16xf32>
    %282 = vector.shape_cast %279 : vector<4x16xf32> to vector<1x1x4x16xf32>
    tpu.vector_store %arg6[%c0_99, %c0_100, %c88, %c0_101], %282 {strides = array<i32>} : memref<1x1x128x16xf32, #tpu.memory_space<vmem>>, vector<1x1x4x16xf32>,
    %283 = vector.extract_strided_slice %6 {offsets = [0, 92], sizes = [64, 4], strides = [1, 1]} : vector<64x128xf32> to vector<64x4xf32>
    %284 = vector.extract_strided_slice %283 {offsets = [0, 0], sizes = [16, 4], strides = [1, 1]} : vector<64x4xf32> to vector<16x4xf32>
    %285 = vector.extract_strided_slice %283 {offsets = [16, 0], sizes = [16, 4], strides = [1, 1]} : vector<64x4xf32> to vector<16x4xf32>
    %286 = vector.extract_strided_slice %283 {offsets = [32, 0], sizes = [16, 4], strides = [1, 1]} : vector<64x4xf32> to vector<16x4xf32>
    %287 = vector.extract_strided_slice %283 {offsets = [48, 0], sizes = [16, 4], strides = [1, 1]} : vector<64x4xf32> to vector<16x4xf32>
    %288 = tpu.concatenate %284, %285, %286, %287 in 1 : vector<16x4xf32>, vector<16x4xf32>, vector<16x4xf32>, vector<16x4xf32> -> vector<16x16xf32>
    %289 = vector.extract_strided_slice %1 {offsets = [23, 0, 0], sizes = [1, 4, 16], strides = [1, 1, 1]} : vector<32x4x16xf32> to vector<1x4x16xf32>
    %290 = vector.shape_cast %289 : vector<1x4x16xf32> to vector<4x16xf32>
    %cst_102 = arith.constant dense<0.000000e+00> : vector<4x16xf32>
    %291 = tpu.matmul %290, %288, %cst_102 {dimension_numbers = #tpu.dot_dimension_numbers<[1], [0], [0], [1], [0, 0, 1, 1], [], []>} : vector<4x16xf32>, vector<16x16xf32>, vector<4x16xf32> -> vector<4x16xf32>
    %c0_103 = arith.constant 0 : index
    %c0_104 = arith.constant 0 : index
    %c92 = arith.constant 92 : index
    %c0_105 = arith.constant 0 : index
    %292 = vector.load %arg6[%c0_103, %c0_104, %c92, %c0_105] : memref<1x1x128x16xf32, #tpu.memory_space<vmem>>, vector<1x1x4x16xf32>
    %293 = vector.shape_cast %292 : vector<1x1x4x16xf32> to vector<4x16xf32>
    %294 = vector.shape_cast %291 : vector<4x16xf32> to vector<1x1x4x16xf32>
    tpu.vector_store %arg6[%c0_103, %c0_104, %c92, %c0_105], %294 {strides = array<i32>} : memref<1x1x128x16xf32, #tpu.memory_space<vmem>>, vector<1x1x4x16xf32>,
    %295 = vector.extract_strided_slice %6 {offsets = [0, 96], sizes = [64, 4], strides = [1, 1]} : vector<64x128xf32> to vector<64x4xf32>
    %296 = vector.extract_strided_slice %295 {offsets = [0, 0], sizes = [16, 4], strides = [1, 1]} : vector<64x4xf32> to vector<16x4xf32>
    %297 = vector.extract_strided_slice %295 {offsets = [16, 0], sizes = [16, 4], strides = [1, 1]} : vector<64x4xf32> to vector<16x4xf32>
    %298 = vector.extract_strided_slice %295 {offsets = [32, 0], sizes = [16, 4], strides = [1, 1]} : vector<64x4xf32> to vector<16x4xf32>
    %299 = vector.extract_strided_slice %295 {offsets = [48, 0], sizes = [16, 4], strides = [1, 1]} : vector<64x4xf32> to vector<16x4xf32>
    %300 = tpu.concatenate %296, %297, %298, %299 in 1 : vector<16x4xf32>, vector<16x4xf32>, vector<16x4xf32>, vector<16x4xf32> -> vector<16x16xf32>
    %301 = vector.extract_strided_slice %1 {offsets = [24, 0, 0], sizes = [1, 4, 16], strides = [1, 1, 1]} : vector<32x4x16xf32> to vector<1x4x16xf32>
    %302 = vector.shape_cast %301 : vector<1x4x16xf32> to vector<4x16xf32>
    %cst_106 = arith.constant dense<0.000000e+00> : vector<4x16xf32>
    %303 = tpu.matmul %302, %300, %cst_106 {dimension_numbers = #tpu.dot_dimension_numbers<[1], [0], [0], [1], [0, 0, 1, 1], [], []>} : vector<4x16xf32>, vector<16x16xf32>, vector<4x16xf32> -> vector<4x16xf32>
    %c0_107 = arith.constant 0 : index
    %c0_108 = arith.constant 0 : index
    %c96 = arith.constant 96 : index
    %c0_109 = arith.constant 0 : index
    %304 = vector.load %arg6[%c0_107, %c0_108, %c96, %c0_109] : memref<1x1x128x16xf32, #tpu.memory_space<vmem>>, vector<1x1x4x16xf32>
    %305 = vector.shape_cast %304 : vector<1x1x4x16xf32> to vector<4x16xf32>
    %306 = vector.shape_cast %303 : vector<4x16xf32> to vector<1x1x4x16xf32>
    tpu.vector_store %arg6[%c0_107, %c0_108, %c96, %c0_109], %306 {strides = array<i32>} : memref<1x1x128x16xf32, #tpu.memory_space<vmem>>, vector<1x1x4x16xf32>,
    %307 = vector.extract_strided_slice %6 {offsets = [0, 100], sizes = [64, 4], strides = [1, 1]} : vector<64x128xf32> to vector<64x4xf32>
    %308 = vector.extract_strided_slice %307 {offsets = [0, 0], sizes = [16, 4], strides = [1, 1]} : vector<64x4xf32> to vector<16x4xf32>
    %309 = vector.extract_strided_slice %307 {offsets = [16, 0], sizes = [16, 4], strides = [1, 1]} : vector<64x4xf32> to vector<16x4xf32>
    %310 = vector.extract_strided_slice %307 {offsets = [32, 0], sizes = [16, 4], strides = [1, 1]} : vector<64x4xf32> to vector<16x4xf32>
    %311 = vector.extract_strided_slice %307 {offsets = [48, 0], sizes = [16, 4], strides = [1, 1]} : vector<64x4xf32> to vector<16x4xf32>
    %312 = tpu.concatenate %308, %309, %310, %311 in 1 : vector<16x4xf32>, vector<16x4xf32>, vector<16x4xf32>, vector<16x4xf32> -> vector<16x16xf32>
    %313 = vector.extract_strided_slice %1 {offsets = [25, 0, 0], sizes = [1, 4, 16], strides = [1, 1, 1]} : vector<32x4x16xf32> to vector<1x4x16xf32>
    %314 = vector.shape_cast %313 : vector<1x4x16xf32> to vector<4x16xf32>
    %cst_110 = arith.constant dense<0.000000e+00> : vector<4x16xf32>
    %315 = tpu.matmul %314, %312, %cst_110 {dimension_numbers = #tpu.dot_dimension_numbers<[1], [0], [0], [1], [0, 0, 1, 1], [], []>} : vector<4x16xf32>, vector<16x16xf32>, vector<4x16xf32> -> vector<4x16xf32>
    %c0_111 = arith.constant 0 : index
    %c0_112 = arith.constant 0 : index
    %c100 = arith.constant 100 : index
    %c0_113 = arith.constant 0 : index
    %316 = vector.load %arg6[%c0_111, %c0_112, %c100, %c0_113] : memref<1x1x128x16xf32, #tpu.memory_space<vmem>>, vector<1x1x4x16xf32>
    %317 = vector.shape_cast %316 : vector<1x1x4x16xf32> to vector<4x16xf32>
    %318 = vector.shape_cast %315 : vector<4x16xf32> to vector<1x1x4x16xf32>
    tpu.vector_store %arg6[%c0_111, %c0_112, %c100, %c0_113], %318 {strides = array<i32>} : memref<1x1x128x16xf32, #tpu.memory_space<vmem>>, vector<1x1x4x16xf32>,
    %319 = vector.extract_strided_slice %6 {offsets = [0, 104], sizes = [64, 4], strides = [1, 1]} : vector<64x128xf32> to vector<64x4xf32>
    %320 = vector.extract_strided_slice %319 {offsets = [0, 0], sizes = [16, 4], strides = [1, 1]} : vector<64x4xf32> to vector<16x4xf32>
    %321 = vector.extract_strided_slice %319 {offsets = [16, 0], sizes = [16, 4], strides = [1, 1]} : vector<64x4xf32> to vector<16x4xf32>
    %322 = vector.extract_strided_slice %319 {offsets = [32, 0], sizes = [16, 4], strides = [1, 1]} : vector<64x4xf32> to vector<16x4xf32>
    %323 = vector.extract_strided_slice %319 {offsets = [48, 0], sizes = [16, 4], strides = [1, 1]} : vector<64x4xf32> to vector<16x4xf32>
    %324 = tpu.concatenate %320, %321, %322, %323 in 1 : vector<16x4xf32>, vector<16x4xf32>, vector<16x4xf32>, vector<16x4xf32> -> vector<16x16xf32>
    %325 = vector.extract_strided_slice %1 {offsets = [26, 0, 0], sizes = [1, 4, 16], strides = [1, 1, 1]} : vector<32x4x16xf32> to vector<1x4x16xf32>
    %326 = vector.shape_cast %325 : vector<1x4x16xf32> to vector<4x16xf32>
    %cst_114 = arith.constant dense<0.000000e+00> : vector<4x16xf32>
    %327 = tpu.matmul %326, %324, %cst_114 {dimension_numbers = #tpu.dot_dimension_numbers<[1], [0], [0], [1], [0, 0, 1, 1], [], []>} : vector<4x16xf32>, vector<16x16xf32>, vector<4x16xf32> -> vector<4x16xf32>
    %c0_115 = arith.constant 0 : index
    %c0_116 = arith.constant 0 : index
    %c104 = arith.constant 104 : index
    %c0_117 = arith.constant 0 : index
    %328 = vector.load %arg6[%c0_115, %c0_116, %c104, %c0_117] : memref<1x1x128x16xf32, #tpu.memory_space<vmem>>, vector<1x1x4x16xf32>
    %329 = vector.shape_cast %328 : vector<1x1x4x16xf32> to vector<4x16xf32>
    %330 = vector.shape_cast %327 : vector<4x16xf32> to vector<1x1x4x16xf32>
    tpu.vector_store %arg6[%c0_115, %c0_116, %c104, %c0_117], %330 {strides = array<i32>} : memref<1x1x128x16xf32, #tpu.memory_space<vmem>>, vector<1x1x4x16xf32>,
    %331 = vector.extract_strided_slice %6 {offsets = [0, 108], sizes = [64, 4], strides = [1, 1]} : vector<64x128xf32> to vector<64x4xf32>
    %332 = vector.extract_strided_slice %331 {offsets = [0, 0], sizes = [16, 4], strides = [1, 1]} : vector<64x4xf32> to vector<16x4xf32>
    %333 = vector.extract_strided_slice %331 {offsets = [16, 0], sizes = [16, 4], strides = [1, 1]} : vector<64x4xf32> to vector<16x4xf32>
    %334 = vector.extract_strided_slice %331 {offsets = [32, 0], sizes = [16, 4], strides = [1, 1]} : vector<64x4xf32> to vector<16x4xf32>
    %335 = vector.extract_strided_slice %331 {offsets = [48, 0], sizes = [16, 4], strides = [1, 1]} : vector<64x4xf32> to vector<16x4xf32>
    %336 = tpu.concatenate %332, %333, %334, %335 in 1 : vector<16x4xf32>, vector<16x4xf32>, vector<16x4xf32>, vector<16x4xf32> -> vector<16x16xf32>
    %337 = vector.extract_strided_slice %1 {offsets = [27, 0, 0], sizes = [1, 4, 16], strides = [1, 1, 1]} : vector<32x4x16xf32> to vector<1x4x16xf32>
    %338 = vector.shape_cast %337 : vector<1x4x16xf32> to vector<4x16xf32>
    %cst_118 = arith.constant dense<0.000000e+00> : vector<4x16xf32>
    %339 = tpu.matmul %338, %336, %cst_118 {dimension_numbers = #tpu.dot_dimension_numbers<[1], [0], [0], [1], [0, 0, 1, 1], [], []>} : vector<4x16xf32>, vector<16x16xf32>, vector<4x16xf32> -> vector<4x16xf32>
    %c0_119 = arith.constant 0 : index
    %c0_120 = arith.constant 0 : index
    %c108 = arith.constant 108 : index
    %c0_121 = arith.constant 0 : index
    %340 = vector.load %arg6[%c0_119, %c0_120, %c108, %c0_121] : memref<1x1x128x16xf32, #tpu.memory_space<vmem>>, vector<1x1x4x16xf32>
    %341 = vector.shape_cast %340 : vector<1x1x4x16xf32> to vector<4x16xf32>
    %342 = vector.shape_cast %339 : vector<4x16xf32> to vector<1x1x4x16xf32>
    tpu.vector_store %arg6[%c0_119, %c0_120, %c108, %c0_121], %342 {strides = array<i32>} : memref<1x1x128x16xf32, #tpu.memory_space<vmem>>, vector<1x1x4x16xf32>,
    %343 = vector.extract_strided_slice %6 {offsets = [0, 112], sizes = [64, 4], strides = [1, 1]} : vector<64x128xf32> to vector<64x4xf32>
    %344 = vector.extract_strided_slice %343 {offsets = [0, 0], sizes = [16, 4], strides = [1, 1]} : vector<64x4xf32> to vector<16x4xf32>
    %345 = vector.extract_strided_slice %343 {offsets = [16, 0], sizes = [16, 4], strides = [1, 1]} : vector<64x4xf32> to vector<16x4xf32>
    %346 = vector.extract_strided_slice %343 {offsets = [32, 0], sizes = [16, 4], strides = [1, 1]} : vector<64x4xf32> to vector<16x4xf32>
    %347 = vector.extract_strided_slice %343 {offsets = [48, 0], sizes = [16, 4], strides = [1, 1]} : vector<64x4xf32> to vector<16x4xf32>
    %348 = tpu.concatenate %344, %345, %346, %347 in 1 : vector<16x4xf32>, vector<16x4xf32>, vector<16x4xf32>, vector<16x4xf32> -> vector<16x16xf32>
    %349 = vector.extract_strided_slice %1 {offsets = [28, 0, 0], sizes = [1, 4, 16], strides = [1, 1, 1]} : vector<32x4x16xf32> to vector<1x4x16xf32>
    %350 = vector.shape_cast %349 : vector<1x4x16xf32> to vector<4x16xf32>
    %cst_122 = arith.constant dense<0.000000e+00> : vector<4x16xf32>
    %351 = tpu.matmul %350, %348, %cst_122 {dimension_numbers = #tpu.dot_dimension_numbers<[1], [0], [0], [1], [0, 0, 1, 1], [], []>} : vector<4x16xf32>, vector<16x16xf32>, vector<4x16xf32> -> vector<4x16xf32>
    %c0_123 = arith.constant 0 : index
    %c0_124 = arith.constant 0 : index
    %c112 = arith.constant 112 : index
    %c0_125 = arith.constant 0 : index
    %352 = vector.load %arg6[%c0_123, %c0_124, %c112, %c0_125] : memref<1x1x128x16xf32, #tpu.memory_space<vmem>>, vector<1x1x4x16xf32>
    %353 = vector.shape_cast %352 : vector<1x1x4x16xf32> to vector<4x16xf32>
    %354 = vector.shape_cast %351 : vector<4x16xf32> to vector<1x1x4x16xf32>
    tpu.vector_store %arg6[%c0_123, %c0_124, %c112, %c0_125], %354 {strides = array<i32>} : memref<1x1x128x16xf32, #tpu.memory_space<vmem>>, vector<1x1x4x16xf32>,
    %355 = vector.extract_strided_slice %6 {offsets = [0, 116], sizes = [64, 4], strides = [1, 1]} : vector<64x128xf32> to vector<64x4xf32>
    %356 = vector.extract_strided_slice %355 {offsets = [0, 0], sizes = [16, 4], strides = [1, 1]} : vector<64x4xf32> to vector<16x4xf32>
    %357 = vector.extract_strided_slice %355 {offsets = [16, 0], sizes = [16, 4], strides = [1, 1]} : vector<64x4xf32> to vector<16x4xf32>
    %358 = vector.extract_strided_slice %355 {offsets = [32, 0], sizes = [16, 4], strides = [1, 1]} : vector<64x4xf32> to vector<16x4xf32>
    %359 = vector.extract_strided_slice %355 {offsets = [48, 0], sizes = [16, 4], strides = [1, 1]} : vector<64x4xf32> to vector<16x4xf32>
    %360 = tpu.concatenate %356, %357, %358, %359 in 1 : vector<16x4xf32>, vector<16x4xf32>, vector<16x4xf32>, vector<16x4xf32> -> vector<16x16xf32>
    %361 = vector.extract_strided_slice %1 {offsets = [29, 0, 0], sizes = [1, 4, 16], strides = [1, 1, 1]} : vector<32x4x16xf32> to vector<1x4x16xf32>
    %362 = vector.shape_cast %361 : vector<1x4x16xf32> to vector<4x16xf32>
    %cst_126 = arith.constant dense<0.000000e+00> : vector<4x16xf32>
    %363 = tpu.matmul %362, %360, %cst_126 {dimension_numbers = #tpu.dot_dimension_numbers<[1], [0], [0], [1], [0, 0, 1, 1], [], []>} : vector<4x16xf32>, vector<16x16xf32>, vector<4x16xf32> -> vector<4x16xf32>
    %c0_127 = arith.constant 0 : index
    %c0_128 = arith.constant 0 : index
    %c116 = arith.constant 116 : index
    %c0_129 = arith.constant 0 : index
    %364 = vector.load %arg6[%c0_127, %c0_128, %c116, %c0_129] : memref<1x1x128x16xf32, #tpu.memory_space<vmem>>, vector<1x1x4x16xf32>
    %365 = vector.shape_cast %364 : vector<1x1x4x16xf32> to vector<4x16xf32>
    %366 = vector.shape_cast %363 : vector<4x16xf32> to vector<1x1x4x16xf32>
    tpu.vector_store %arg6[%c0_127, %c0_128, %c116, %c0_129], %366 {strides = array<i32>} : memref<1x1x128x16xf32, #tpu.memory_space<vmem>>, vector<1x1x4x16xf32>,
    %367 = vector.extract_strided_slice %6 {offsets = [0, 120], sizes = [64, 4], strides = [1, 1]} : vector<64x128xf32> to vector<64x4xf32>
    %368 = vector.extract_strided_slice %367 {offsets = [0, 0], sizes = [16, 4], strides = [1, 1]} : vector<64x4xf32> to vector<16x4xf32>
    %369 = vector.extract_strided_slice %367 {offsets = [16, 0], sizes = [16, 4], strides = [1, 1]} : vector<64x4xf32> to vector<16x4xf32>
    %370 = vector.extract_strided_slice %367 {offsets = [32, 0], sizes = [16, 4], strides = [1, 1]} : vector<64x4xf32> to vector<16x4xf32>
    %371 = vector.extract_strided_slice %367 {offsets = [48, 0], sizes = [16, 4], strides = [1, 1]} : vector<64x4xf32> to vector<16x4xf32>
    %372 = tpu.concatenate %368, %369, %370, %371 in 1 : vector<16x4xf32>, vector<16x4xf32>, vector<16x4xf32>, vector<16x4xf32> -> vector<16x16xf32>
    %373 = vector.extract_strided_slice %1 {offsets = [30, 0, 0], sizes = [1, 4, 16], strides = [1, 1, 1]} : vector<32x4x16xf32> to vector<1x4x16xf32>
    %374 = vector.shape_cast %373 : vector<1x4x16xf32> to vector<4x16xf32>
    %cst_130 = arith.constant dense<0.000000e+00> : vector<4x16xf32>
    %375 = tpu.matmul %374, %372, %cst_130 {dimension_numbers = #tpu.dot_dimension_numbers<[1], [0], [0], [1], [0, 0, 1, 1], [], []>} : vector<4x16xf32>, vector<16x16xf32>, vector<4x16xf32> -> vector<4x16xf32>
    %c0_131 = arith.constant 0 : index
    %c0_132 = arith.constant 0 : index
    %c120 = arith.constant 120 : index
    %c0_133 = arith.constant 0 : index
    %376 = vector.load %arg6[%c0_131, %c0_132, %c120, %c0_133] : memref<1x1x128x16xf32, #tpu.memory_space<vmem>>, vector<1x1x4x16xf32>
    %377 = vector.shape_cast %376 : vector<1x1x4x16xf32> to vector<4x16xf32>
    %378 = vector.shape_cast %375 : vector<4x16xf32> to vector<1x1x4x16xf32>
    tpu.vector_store %arg6[%c0_131, %c0_132, %c120, %c0_133], %378 {strides = array<i32>} : memref<1x1x128x16xf32, #tpu.memory_space<vmem>>, vector<1x1x4x16xf32>,
    %379 = vector.extract_strided_slice %6 {offsets = [0, 124], sizes = [64, 4], strides = [1, 1]} : vector<64x128xf32> to vector<64x4xf32>
    %380 = vector.extract_strided_slice %379 {offsets = [0, 0], sizes = [16, 4], strides = [1, 1]} : vector<64x4xf32> to vector<16x4xf32>
    %381 = vector.extract_strided_slice %379 {offsets = [16, 0], sizes = [16, 4], strides = [1, 1]} : vector<64x4xf32> to vector<16x4xf32>
    %382 = vector.extract_strided_slice %379 {offsets = [32, 0], sizes = [16, 4], strides = [1, 1]} : vector<64x4xf32> to vector<16x4xf32>
    %383 = vector.extract_strided_slice %379 {offsets = [48, 0], sizes = [16, 4], strides = [1, 1]} : vector<64x4xf32> to vector<16x4xf32>
    %384 = tpu.concatenate %380, %381, %382, %383 in 1 : vector<16x4xf32>, vector<16x4xf32>, vector<16x4xf32>, vector<16x4xf32> -> vector<16x16xf32>
    %385 = vector.extract_strided_slice %1 {offsets = [31, 0, 0], sizes = [1, 4, 16], strides = [1, 1, 1]} : vector<32x4x16xf32> to vector<1x4x16xf32>
    %386 = vector.shape_cast %385 : vector<1x4x16xf32> to vector<4x16xf32>
    %cst_134 = arith.constant dense<0.000000e+00> : vector<4x16xf32>
    %387 = tpu.matmul %386, %384, %cst_134 {dimension_numbers = #tpu.dot_dimension_numbers<[1], [0], [0], [1], [0, 0, 1, 1], [], []>} : vector<4x16xf32>, vector<16x16xf32>, vector<4x16xf32> -> vector<4x16xf32>
    %c0_135 = arith.constant 0 : index
    %c0_136 = arith.constant 0 : index
    %c124 = arith.constant 124 : index
    %c0_137 = arith.constant 0 : index
    %388 = vector.load %arg6[%c0_135, %c0_136, %c124, %c0_137] : memref<1x1x128x16xf32, #tpu.memory_space<vmem>>, vector<1x1x4x16xf32>
    %389 = vector.shape_cast %388 : vector<1x1x4x16xf32> to vector<4x16xf32>
    %390 = vector.shape_cast %387 : vector<4x16xf32> to vector<1x1x4x16xf32>
    tpu.vector_store %arg6[%c0_135, %c0_136, %c124, %c0_137], %390 {strides = array<i32>} : memref<1x1x128x16xf32, #tpu.memory_space<vmem>>, vector<1x1x4x16xf32>,
    return
  }
  func.func @transform_0(%arg0: i32, %arg1: i32, %arg2: memref<1xi32, #tpu.memory_space<smem>>) -> (i32, i32, i32, i32) {
    %c0_i32 = arith.constant 0 : i32
    %c0_i32_0 = arith.constant 0 : i32
    %c0_i32_1 = arith.constant 0 : i32
    %c0_i32_2 = arith.constant 0 : i32
    return %arg1, %c0_i32, %c0_i32_0, %c0_i32_1 : i32, i32, i32, i32
  }
  func.func @transform_1(%arg0: i32, %arg1: i32, %arg2: memref<1xi32, #tpu.memory_space<smem>>) -> (i32, i32, i32) {
    %c0_i32 = arith.constant 0 : i32
    %c0_i32_0 = arith.constant 0 : i32
    %c0_i32_1 = arith.constant 0 : i32
    return %arg1, %c0_i32, %c0_i32_0 : i32, i32, i32
  }
  func.func @transform_2(%arg0: i32, %arg1: i32, %arg2: memref<1xi32, #tpu.memory_space<smem>>) -> (i32, i32, i32) {
    %0 = arith.index_cast %arg1 : i32 to index
    %1 = memref.load %arg2[%0] : memref<1xi32, #tpu.memory_space<smem>>
    %c0_i32 = arith.constant 0 : i32
    %c0_i32_0 = arith.constant 0 : i32
    return %1, %arg0, %c0_i32 : i32, i32, i32
  }
  func.func @transform_3(%arg0: i32, %arg1: i32, %arg2: memref<1xi32, #tpu.memory_space<smem>>) -> (i32, i32, i32, i32) {
    %c0_i32 = arith.constant 0 : i32
    %c0_i32_0 = arith.constant 0 : i32
    %c0_i32_1 = arith.constant 0 : i32
    return %arg1, %arg0, %c0_i32, %c0_i32_0 : i32, i32, i32, i32
  }
}

</mosaic_0001>

<llo_original>
// kernel: tpu_custom_call.1
$region0: #{tpu_custom_call.1}
  #allocation0 [shape = 'u32[]', space=smem, size = 0x4, offset = 0x4, fixed_abs, tag = 'smem constant byte address 0x4 - core index']
  #allocation1 [shape = 'u32[72,128]{1,0:T(1,128)}', space=vmem, size = 0x9000, scoped, tag = 'internal scratch']
  #allocation2 [shape = 's32[1]{0}', space=sflag, size = 0x4, scoped, tag = 'scoped memory for tpu_custom_call.1']
  #allocation3 [shape = 's32[1]{0:T(128)S(6)}', space=smem, size = 0x200, scoped, tag = 'prefetched SMEM operand 0']
  %s0 = inlined_call_operand.<no memory space> [shape: s32[1], index: 0, kind: input, shape index: {}]
  %s1 = inlined_call_operand.vmem [shape: f32[1,32,4,16], index: 1, kind: input, shape index: {}]
  %s2 = inlined_call_operand.vmem [shape: f32[1,16,128], index: 2, kind: input, shape index: {}]
  %s3 = inlined_call_operand.vmem [shape: f32[2,64,16], index: 3, kind: input, shape index: {}]
  %s4 = inlined_call_operand.vmem [shape: f32[1,1,128,16], index: 4, kind: output, shape index: {}]
  %s5 = sld [smem:[#allocation0]]
  $region22: #{tpu_custom_call.1} parent=0
    _
  %s7 = ssub.s32 1, %s5
  %s8 = scalar_select 0, %s7, %s5
  %9 = sst [smem:[#allocation3]] %s0
  // Predicated region
  $region2: #{tpu_custom_call.1} parent=0 // pred_check
    _
  $region3: #{tpu_custom_call.1} parent=0 // pred_check_branch
    %11 = sbr.rel (0) target = $region5
  $region4: #{tpu_custom_call.1} parent=0 // pred_region
    _
  $region5: #{tpu_custom_call.1} parent=0 // pred_fallthru
    _
  // Predicated region
  $region6: #{tpu_custom_call.1} parent=0 // pred_check
    _
  $region7: #{tpu_custom_call.1} parent=0 // pred_check_branch
    %13 = sbr.rel (0) target = $region9
  $region8: #{tpu_custom_call.1} parent=0 // pred_region
    _
  $region9: #{tpu_custom_call.1} parent=0 // pred_fallthru
    _
  // Predicated region
  $region10: #{tpu_custom_call.1} parent=0 // pred_check
    _
  $region11: #{tpu_custom_call.1} parent=0 // pred_check_branch
    %15 = sbr.rel (0) target = $region13
  $region12: #{tpu_custom_call.1} parent=0 // pred_region
    %s16 = sld [smem:[#allocation3]]
    %p17 = scmp.lt.s32.totalorder %s16, 1
    %s18 = scalar_select %p17, %s16, 1
    %s19 = smul.addr %s18, 8
    %s20 = smul.addr %s19, 8
    %s21 = scalar_lea.vmem %s3, %s20
    %s22 = sld [smem:[#allocation3]]
  $region13: #{tpu_custom_call.1} parent=0 // pred_fallthru
    _
  %s23 = sld [smem:[#allocation3]]
  %p24 = scmp.lt.s32.totalorder %s23, 1
  %s25 = scalar_select %p24, %s23, 1
  %s26 = smul.addr %s25, 8
  %s27 = smul.addr %s26, 8
  %s28 = scalar_lea.vmem %s3, %s27
  %s29 = sld [smem:[#allocation3]]
  %p30 = scmp.lt.s32.totalorder %s29, 1
  %s31 = scalar_select %p30, %s29, 1
  %s32 = smul.addr %s31, 8
  %s33 = smul.addr %s32, 8
  %s34 = scalar_lea.vmem %s3, %s33
  %s35 = sld [smem:[#allocation3]]
  %v36 = vld [vmem:[%s1] sm:$0xf]
  %v37 = vld [vmem:[%s1 + $0x4] sm:$0xf]
  %v38 = vld [vmem:[%s1 + $0x8] sm:$0xf]
  %v39 = vld [vmem:[%s1 + $0xc] sm:$0xf]
  %v40 = vld [vmem:[%s1 + $0x10] sm:$0xf]
  %v41 = vld [vmem:[%s1 + $0x14] sm:$0xf]
  %v42 = vld [vmem:[%s1 + $0x18] sm:$0xf]
  %v43 = vld [vmem:[%s1 + $0x1c] sm:$0xf]
  %v44 = vld [vmem:[%s1 + $0x20] sm:$0xf]
  %v45 = vld [vmem:[%s1 + $0x24] sm:$0xf]
  %v46 = vld [vmem:[%s1 + $0x28] sm:$0xf]
  %v47 = vld [vmem:[%s1 + $0x2c] sm:$0xf]
  %v48 = vld [vmem:[%s1 + $0x30] sm:$0xf]
  %v49 = vld [vmem:[%s1 + $0x34] sm:$0xf]
  %v50 = vld [vmem:[%s1 + $0x38] sm:$0xf]
  %v51 = vld [vmem:[%s1 + $0x3c] sm:$0xf]
  %v52 = vld [vmem:[%s1 + $0x40] sm:$0xf]
  %v53 = vld [vmem:[%s1 + $0x44] sm:$0xf]
  %v54 = vld [vmem:[%s1 + $0x48] sm:$0xf]
  %v55 = vld [vmem:[%s1 + $0x4c] sm:$0xf]
  %v56 = vld [vmem:[%s1 + $0x50] sm:$0xf]
  %v57 = vld [vmem:[%s1 + $0x54] sm:$0xf]
  %v58 = vld [vmem:[%s1 + $0x58] sm:$0xf]
  %v59 = vld [vmem:[%s1 + $0x5c] sm:$0xf]
  %v60 = vld [vmem:[%s1 + $0x60] sm:$0xf]
  %v61 = vld [vmem:[%s1 + $0x64] sm:$0xf]
  %v62 = vld [vmem:[%s1 + $0x68] sm:$0xf]
  %v63 = vld [vmem:[%s1 + $0x6c] sm:$0xf]
  %v64 = vld [vmem:[%s1 + $0x70] sm:$0xf]
  %v65 = vld [vmem:[%s1 + $0x74] sm:$0xf]
  %v66 = vld [vmem:[%s1 + $0x78] sm:$0xf]
  %v67 = vld [vmem:[%s1 + $0x7c] sm:$0xf]
  %v68 = vld [vmem:[%s2] sm:$0xff]
  %v69 = vld [vmem:[%s2 + $0x8] sm:$0xff]
  %v70 = vld [vmem:[%s34] sm:$0xff]
  %v71 = vld [vmem:[%s34 + $0x8] sm:$0xff]
  %v72 = vld [vmem:[%s34 + $0x10] sm:$0xff]
  %v73 = vld [vmem:[%s34 + $0x18] sm:$0xff]
  %v74 = vld [vmem:[%s34 + $0x20] sm:$0xff]
  %v75 = vld [vmem:[%s34 + $0x28] sm:$0xff]
  %v76 = vld [vmem:[%s34 + $0x30] sm:$0xff]
  %v77 = vld [vmem:[%s34 + $0x38] sm:$0xff]
  %vm78 = vcmask 130048
  %v80 = vsel %vm78, %v70, 0
  %v83 = vsel %vm78, %v71, 0
  %v86 = vsel %vm78, %v72, 0
  %v89 = vsel %vm78, %v73, 0
  %v92 = vsel %vm78, %v74, 0
  %v95 = vsel %vm78, %v75, 0
  %v98 = vsel %vm78, %v76, 0
  %v101 = vsel %vm78, %v77, 0
  %103 = vmatpush.msra.mxu0 0.0
  %104 = vmatpush.msra.mxu0 0.0
  %105 = vmatpush.msra.mxu0 0.0
  %106 = vmatpush.msra.mxu0 0.0
  %107 = vmatpush.msra.mxu0 0.0
  %108 = vmatpush.msra.mxu0 0.0
  %109 = vmatpush.msra.mxu0 0.0
  %110 = vmatpush.msra.mxu0 0.0
  %111 = vmatpush.msra.mxu0 0.0
  %112 = vmatpush.msra.mxu0 0.0
  %113 = vmatpush.msra.mxu0 0.0
  %114 = vmatpush.msra.mxu0 0.0
  %115 = vmatpush.msra.mxu0 0.0
  %116 = vmatpush.msra.mxu0 0.0
  %117 = vmatpush.msra.mxu0 %v69
  %118 = vmatpush.msra.mxu0 %v68
  %119 = vmatmul.f32.gmra.mxu0 %v80
  %v120 = vpop.f32.mrf.mxu0
  %v121 = vadd.f32 0.0, %v120
  %122 = vmatmul.f32.gmra.mxu0 %v83
  %v123 = vpop.f32.mrf.mxu0
  %v124 = vadd.f32 0.0, %v123
  %125 = vmatmul.f32.gmra.mxu0 %v86
  %v126 = vpop.f32.mrf.mxu0
  %v127 = vadd.f32 0.0, %v126
  %128 = vmatmul.f32.gmra.mxu0 %v89
  %v129 = vpop.f32.mrf.mxu0
  %v130 = vadd.f32 0.0, %v129
  %131 = vmatmul.f32.gmra.mxu0 %v92
  %v132 = vpop.f32.mrf.mxu0
  %v133 = vadd.f32 0.0, %v132
  %134 = vmatmul.f32.gmra.mxu0 %v95
  %v135 = vpop.f32.mrf.mxu0
  %v136 = vadd.f32 0.0, %v135
  %137 = vmatmul.f32.gmra.mxu0 %v98
  %v138 = vpop.f32.mrf.mxu0
  %v139 = vadd.f32 0.0, %v138
  %140 = vmatmul.f32.gmra.mxu0 %v101
  %v141 = vpop.f32.mrf.mxu0
  %v142 = vadd.f32 0.0, %v141
  %143 = vdwg.mxu0
  %146 = vrot.lane.b32.xlu0 %v127, 4
  %v147 = vpop.permute.xlu0 %146
  %148 = vrot.lane.b32.xlu0 %v130, 4
  %v149 = vpop.permute.xlu0 %148
  %154 = vrot.lane.b32.xlu0 %v133, 8
  %v155 = vpop.permute.xlu0 %154
  %156 = vrot.lane.b32.xlu0 %v136, 8
  %v157 = vpop.permute.xlu0 %156
  %162 = vrot.lane.b32.xlu0 %v139, 12
  %v163 = vpop.permute.xlu0 %162
  %164 = vrot.lane.b32.xlu0 %v142, 12
  %v165 = vpop.permute.xlu0 %164
  %vm168 = vcmask 31744
  %v169 = vsel %vm168, %v121, %v147
  %v170 = vsel %vm168, %v124, %v149
  %vm171 = vcmask 64512
  %v172 = vsel %vm171, %v169, %v155
  %v173 = vsel %vm171, %v170, %v157
  %vm174 = vcmask 97280
  %v175 = vsel %vm174, %v172, %v163
  %v176 = vsel %vm174, %v173, %v165
  %v178 = vsel %vm78, %v36, 0
  %180 = vmatpush.msra.mxu0 0.0
  %181 = vmatpush.msra.mxu0 0.0
  %182 = vmatpush.msra.mxu0 0.0
  %183 = vmatpush.msra.mxu0 0.0
  %184 = vmatpush.msra.mxu0 0.0
  %185 = vmatpush.msra.mxu0 0.0
  %186 = vmatpush.msra.mxu0 0.0
  %187 = vmatpush.msra.mxu0 0.0
  %188 = vmatpush.msra.mxu0 0.0
  %189 = vmatpush.msra.mxu0 0.0
  %190 = vmatpush.msra.mxu0 0.0
  %191 = vmatpush.msra.mxu0 0.0
  %192 = vmatpush.msra.mxu0 0.0
  %193 = vmatpush.msra.mxu0 0.0
  %194 = vmatpush.msra.mxu0 %v176
  %195 = vmatpush.msra.mxu0 %v175
  %196 = vmatmul.f32.gmra.mxu0 %v178
  %v197 = vpop.f32.mrf.mxu0
  %v198 = vadd.f32 0.0, %v197
  %199 = vdwg.mxu0
  %vm200 = vcmask 125952
  %201 = vst.msk [vmem:[%s4] sm:$0xf] %vm200, %v198
  %204 = vrot.lane.b32.xlu0 %v121, 124
  %v205 = vpop.permute.xlu0 %204
  %206 = vrot.lane.b32.xlu0 %v124, 124
  %v207 = vpop.permute.xlu0 %206
  %210 = vrot.lane.b32.xlu0 %v133, 4
  %v211 = vpop.permute.xlu0 %210
  %212 = vrot.lane.b32.xlu0 %v136, 4
  %v213 = vpop.permute.xlu0 %212
  %216 = vrot.lane.b32.xlu0 %v139, 8
  %v217 = vpop.permute.xlu0 %216
  %218 = vrot.lane.b32.xlu0 %v142, 8
  %v219 = vpop.permute.xlu0 %218
  %v222 = vsel %vm168, %v205, %v127
  %v223 = vsel %vm168, %v207, %v130
  %v224 = vsel %vm171, %v222, %v211
  %v225 = vsel %vm171, %v223, %v213
  %v226 = vsel %vm174, %v224, %v217
  %v227 = vsel %vm174, %v225, %v219
  %v229 = vsel %vm78, %v37, 0
  %231 = vmatpush.msra.mxu0 0.0
  %232 = vmatpush.msra.mxu0 0.0
  %233 = vmatpush.msra.mxu0 0.0
  %234 = vmatpush.msra.mxu0 0.0
  %235 = vmatpush.msra.mxu0 0.0
  %236 = vmatpush.msra.mxu0 0.0
  %237 = vmatpush.msra.mxu0 0.0
  %238 = vmatpush.msra.mxu0 0.0
  %239 = vmatpush.msra.mxu0 0.0
  %240 = vmatpush.msra.mxu0 0.0
  %241 = vmatpush.msra.mxu0 0.0
  %242 = vmatpush.msra.mxu0 0.0
  %243 = vmatpush.msra.mxu0 0.0
  %244 = vmatpush.msra.mxu0 0.0
  %245 = vmatpush.msra.mxu0 %v227
  %246 = vmatpush.msra.mxu0 %v226
  %247 = vmatmul.f32.gmra.mxu0 %v229
  %v248 = vpop.f32.mrf.mxu0
  %v249 = vadd.f32 0.0, %v248
  %250 = vdwg.mxu0
  %251 = vst.msk [vmem:[%s4 + $0x4] sm:$0xf] %vm200, %v249
  %252 = vrot.lane.b32.xlu0 %v121, 120
  %v253 = vpop.permute.xlu0 %252
  %254 = vrot.lane.b32.xlu0 %v124, 120
  %v255 = vpop.permute.xlu0 %254
  %258 = vrot.lane.b32.xlu0 %v127, 124
  %v259 = vpop.permute.xlu0 %258
  %260 = vrot.lane.b32.xlu0 %v130, 124
  %v261 = vpop.permute.xlu0 %260
  %264 = vrot.lane.b32.xlu0 %v139, 4
  %v265 = vpop.permute.xlu0 %264
  %266 = vrot.lane.b32.xlu0 %v142, 4
  %v267 = vpop.permute.xlu0 %266
  %v270 = vsel %vm168, %v253, %v259
  %v271 = vsel %vm168, %v255, %v261
  %v272 = vsel %vm171, %v270, %v133
  %v273 = vsel %vm171, %v271, %v136
  %v274 = vsel %vm174, %v272, %v265
  %v275 = vsel %vm174, %v273, %v267
  %v277 = vsel %vm78, %v38, 0
  %279 = vmatpush.msra.mxu0 0.0
  %280 = vmatpush.msra.mxu0 0.0
  %281 = vmatpush.msra.mxu0 0.0
  %282 = vmatpush.msra.mxu0 0.0
  %283 = vmatpush.msra.mxu0 0.0
  %284 = vmatpush.msra.mxu0 0.0
  %285 = vmatpush.msra.mxu0 0.0
  %286 = vmatpush.msra.mxu0 0.0
  %287 = vmatpush.msra.mxu0 0.0
  %288 = vmatpush.msra.mxu0 0.0
  %289 = vmatpush.msra.mxu0 0.0
  %290 = vmatpush.msra.mxu0 0.0
  %291 = vmatpush.msra.mxu0 0.0
  %292 = vmatpush.msra.mxu0 0.0
  %293 = vmatpush.msra.mxu0 %v275
  %294 = vmatpush.msra.mxu0 %v274
  %295 = vmatmul.f32.gmra.mxu0 %v277
  %v296 = vpop.f32.mrf.mxu0
  %v297 = vadd.f32 0.0, %v296
  %298 = vdwg.mxu0
  %299 = vst.msk [vmem:[%s4 + $0x8] sm:$0xf] %vm200, %v297
  %300 = vrot.lane.b32.xlu0 %v121, 116
  %v301 = vpop.permute.xlu0 %300
  %302 = vrot.lane.b32.xlu0 %v124, 116
  %v303 = vpop.permute.xlu0 %302
  %306 = vrot.lane.b32.xlu0 %v127, 120
  %v307 = vpop.permute.xlu0 %306
  %308 = vrot.lane.b32.xlu0 %v130, 120
  %v309 = vpop.permute.xlu0 %308
  %312 = vrot.lane.b32.xlu0 %v133, 124
  %v313 = vpop.permute.xlu0 %312
  %314 = vrot.lane.b32.xlu0 %v136, 124
  %v315 = vpop.permute.xlu0 %314
  %v318 = vsel %vm168, %v301, %v307
  %v319 = vsel %vm168, %v303, %v309
  %v320 = vsel %vm171, %v318, %v313
  %v321 = vsel %vm171, %v319, %v315
  %v322 = vsel %vm174, %v320, %v139
  %v323 = vsel %vm174, %v321, %v142
  %v325 = vsel %vm78, %v39, 0
  %327 = vmatpush.msra.mxu0 0.0
  %328 = vmatpush.msra.mxu0 0.0
  %329 = vmatpush.msra.mxu0 0.0
  %330 = vmatpush.msra.mxu0 0.0
  %331 = vmatpush.msra.mxu0 0.0
  %332 = vmatpush.msra.mxu0 0.0
  %333 = vmatpush.msra.mxu0 0.0
  %334 = vmatpush.msra.mxu0 0.0
  %335 = vmatpush.msra.mxu0 0.0
  %336 = vmatpush.msra.mxu0 0.0
  %337 = vmatpush.msra.mxu0 0.0
  %338 = vmatpush.msra.mxu0 0.0
  %339 = vmatpush.msra.mxu0 0.0
  %340 = vmatpush.msra.mxu0 0.0
  %341 = vmatpush.msra.mxu0 %v323
  %342 = vmatpush.msra.mxu0 %v322
  %343 = vmatmul.f32.gmra.mxu0 %v325
  %v344 = vpop.f32.mrf.mxu0
  %v345 = vadd.f32 0.0, %v344
  %346 = vdwg.mxu0
  %347 = vst.msk [vmem:[%s4 + $0xc] sm:$0xf] %vm200, %v345
  %348 = vrot.lane.b32.xlu0 %v121, 112
  %v349 = vpop.permute.xlu0 %348
  %350 = vrot.lane.b32.xlu0 %v124, 112
  %v351 = vpop.permute.xlu0 %350
  %354 = vrot.lane.b32.xlu0 %v127, 116
  %v355 = vpop.permute.xlu0 %354
  %356 = vrot.lane.b32.xlu0 %v130, 116
  %v357 = vpop.permute.xlu0 %356
  %360 = vrot.lane.b32.xlu0 %v133, 120
  %v361 = vpop.permute.xlu0 %360
  %362 = vrot.lane.b32.xlu0 %v136, 120
  %v363 = vpop.permute.xlu0 %362
  %366 = vrot.lane.b32.xlu0 %v139, 124
  %v367 = vpop.permute.xlu0 %366
  %368 = vrot.lane.b32.xlu0 %v142, 124
  %v369 = vpop.permute.xlu0 %368
  %v372 = vsel %vm168, %v349, %v355
  %v373 = vsel %vm168, %v351, %v357
  %v374 = vsel %vm171, %v372, %v361
  %v375 = vsel %vm171, %v373, %v363
  %v376 = vsel %vm174, %v374, %v367
  %v377 = vsel %vm174, %v375, %v369
  %v379 = vsel %vm78, %v40, 0
  %381 = vmatpush.msra.mxu0 0.0
  %382 = vmatpush.msra.mxu0 0.0
  %383 = vmatpush.msra.mxu0 0.0
  %384 = vmatpush.msra.mxu0 0.0
  %385 = vmatpush.msra.mxu0 0.0
  %386 = vmatpush.msra.mxu0 0.0
  %387 = vmatpush.msra.mxu0 0.0
  %388 = vmatpush.msra.mxu0 0.0
  %389 = vmatpush.msra.mxu0 0.0
  %390 = vmatpush.msra.mxu0 0.0
  %391 = vmatpush.msra.mxu0 0.0
  %392 = vmatpush.msra.mxu0 0.0
  %393 = vmatpush.msra.mxu0 0.0
  %394 = vmatpush.msra.mxu0 0.0
  %395 = vmatpush.msra.mxu0 %v377
  %396 = vmatpush.msra.mxu0 %v376
  %397 = vmatmul.f32.gmra.mxu0 %v379
  %v398 = vpop.f32.mrf.mxu0
  %v399 = vadd.f32 0.0, %v398
  %400 = vdwg.mxu0
  %401 = vst.msk [vmem:[%s4 + $0x10] sm:$0xf] %vm200, %v399
  %402 = vrot.lane.b32.xlu0 %v121, 108
  %v403 = vpop.permute.xlu0 %402
  %404 = vrot.lane.b32.xlu0 %v124, 108
  %v405 = vpop.permute.xlu0 %404
  %408 = vrot.lane.b32.xlu0 %v127, 112
  %v409 = vpop.permute.xlu0 %408
  %410 = vrot.lane.b32.xlu0 %v130, 112
  %v411 = vpop.permute.xlu0 %410
  %414 = vrot.lane.b32.xlu0 %v133, 116
  %v415 = vpop.permute.xlu0 %414
  %416 = vrot.lane.b32.xlu0 %v136, 116
  %v417 = vpop.permute.xlu0 %416
  %420 = vrot.lane.b32.xlu0 %v139, 120
  %v421 = vpop.permute.xlu0 %420
  %422 = vrot.lane.b32.xlu0 %v142, 120
  %v423 = vpop.permute.xlu0 %422
  %v426 = vsel %vm168, %v403, %v409
  %v427 = vsel %vm168, %v405, %v411
  %v428 = vsel %vm171, %v426, %v415
  %v429 = vsel %vm171, %v427, %v417
  %v430 = vsel %vm174, %v428, %v421
  %v431 = vsel %vm174, %v429, %v423
  %v433 = vsel %vm78, %v41, 0
  %435 = vmatpush.msra.mxu0 0.0
  %436 = vmatpush.msra.mxu0 0.0
  %437 = vmatpush.msra.mxu0 0.0
  %438 = vmatpush.msra.mxu0 0.0
  %439 = vmatpush.msra.mxu0 0.0
  %440 = vmatpush.msra.mxu0 0.0
  %441 = vmatpush.msra.mxu0 0.0
  %442 = vmatpush.msra.mxu0 0.0
  %443 = vmatpush.msra.mxu0 0.0
  %444 = vmatpush.msra.mxu0 0.0
  %445 = vmatpush.msra.mxu0 0.0
  %446 = vmatpush.msra.mxu0 0.0
  %447 = vmatpush.msra.mxu0 0.0
  %448 = vmatpush.msra.mxu0 0.0
  %449 = vmatpush.msra.mxu0 %v431
  %450 = vmatpush.msra.mxu0 %v430
  %451 = vmatmul.f32.gmra.mxu0 %v433
  %v452 = vpop.f32.mrf.mxu0
  %v453 = vadd.f32 0.0, %v452
  %454 = vdwg.mxu0
  %455 = vst.msk [vmem:[%s4 + $0x14] sm:$0xf] %vm200, %v453
  %456 = vrot.lane.b32.xlu0 %v121, 104
  %v457 = vpop.permute.xlu0 %456
  %458 = vrot.lane.b32.xlu0 %v124, 104
  %v459 = vpop.permute.xlu0 %458
  %462 = vrot.lane.b32.xlu0 %v127, 108
  %v463 = vpop.permute.xlu0 %462
  %464 = vrot.lane.b32.xlu0 %v130, 108
  %v465 = vpop.permute.xlu0 %464
  %468 = vrot.lane.b32.xlu0 %v133, 112
  %v469 = vpop.permute.xlu0 %468
  %470 = vrot.lane.b32.xlu0 %v136, 112
  %v471 = vpop.permute.xlu0 %470
  %474 = vrot.lane.b32.xlu0 %v139, 116
  %v475 = vpop.permute.xlu0 %474
  %476 = vrot.lane.b32.xlu0 %v142, 116
  %v477 = vpop.permute.xlu0 %476
  %v480 = vsel %vm168, %v457, %v463
  %v481 = vsel %vm168, %v459, %v465
  %v482 = vsel %vm171, %v480, %v469
  %v483 = vsel %vm171, %v481, %v471
  %v484 = vsel %vm174, %v482, %v475
  %v485 = vsel %vm174, %v483, %v477
  %v487 = vsel %vm78, %v42, 0
  %489 = vmatpush.msra.mxu0 0.0
  %490 = vmatpush.msra.mxu0 0.0
  %491 = vmatpush.msra.mxu0 0.0
  %492 = vmatpush.msra.mxu0 0.0
  %493 = vmatpush.msra.mxu0 0.0
  %494 = vmatpush.msra.mxu0 0.0
  %495 = vmatpush.msra.mxu0 0.0
  %496 = vmatpush.msra.mxu0 0.0
  %497 = vmatpush.msra.mxu0 0.0
  %498 = vmatpush.msra.mxu0 0.0
  %499 = vmatpush.msra.mxu0 0.0
  %500 = vmatpush.msra.mxu0 0.0
  %501 = vmatpush.msra.mxu0 0.0
  %502 = vmatpush.msra.mxu0 0.0
  %503 = vmatpush.msra.mxu0 %v485
  %504 = vmatpush.msra.mxu0 %v484
  %505 = vmatmul.f32.gmra.mxu0 %v487
  %v506 = vpop.f32.mrf.mxu0
  %v507 = vadd.f32 0.0, %v506
  %508 = vdwg.mxu0
  %509 = vst.msk [vmem:[%s4 + $0x18] sm:$0xf] %vm200, %v507
  %510 = vrot.lane.b32.xlu0 %v121, 100
  %v511 = vpop.permute.xlu0 %510
  %512 = vrot.lane.b32.xlu0 %v124, 100
  %v513 = vpop.permute.xlu0 %512
  %516 = vrot.lane.b32.xlu0 %v127, 104
  %v517 = vpop.permute.xlu0 %516
  %518 = vrot.lane.b32.xlu0 %v130, 104
  %v519 = vpop.permute.xlu0 %518
  %522 = vrot.lane.b32.xlu0 %v133, 108
  %v523 = vpop.permute.xlu0 %522
  %524 = vrot.lane.b32.xlu0 %v136, 108
  %v525 = vpop.permute.xlu0 %524
  %528 = vrot.lane.b32.xlu0 %v139, 112
  %v529 = vpop.permute.xlu0 %528
  %530 = vrot.lane.b32.xlu0 %v142, 112
  %v531 = vpop.permute.xlu0 %530
  %v534 = vsel %vm168, %v511, %v517
  %v535 = vsel %vm168, %v513, %v519
  %v536 = vsel %vm171, %v534, %v523
  %v537 = vsel %vm171, %v535, %v525
  %v538 = vsel %vm174, %v536, %v529
  %v539 = vsel %vm174, %v537, %v531
  %v541 = vsel %vm78, %v43, 0
  %543 = vmatpush.msra.mxu0 0.0
  %544 = vmatpush.msra.mxu0 0.0
  %545 = vmatpush.msra.mxu0 0.0
  %546 = vmatpush.msra.mxu0 0.0
  %547 = vmatpush.msra.mxu0 0.0
  %548 = vmatpush.msra.mxu0 0.0
  %549 = vmatpush.msra.mxu0 0.0
  %550 = vmatpush.msra.mxu0 0.0
  %551 = vmatpush.msra.mxu0 0.0
  %552 = vmatpush.msra.mxu0 0.0
  %553 = vmatpush.msra.mxu0 0.0
  %554 = vmatpush.msra.mxu0 0.0
  %555 = vmatpush.msra.mxu0 0.0
  %556 = vmatpush.msra.mxu0 0.0
  %557 = vmatpush.msra.mxu0 %v539
  %558 = vmatpush.msra.mxu0 %v538
  %559 = vmatmul.f32.gmra.mxu0 %v541
  %v560 = vpop.f32.mrf.mxu0
  %v561 = vadd.f32 0.0, %v560
  %562 = vdwg.mxu0
  %563 = vst.msk [vmem:[%s4 + $0x1c] sm:$0xf] %vm200, %v561
  %564 = vrot.lane.b32.xlu0 %v121, 96
  %v565 = vpop.permute.xlu0 %564
  %566 = vrot.lane.b32.xlu0 %v124, 96
  %v567 = vpop.permute.xlu0 %566
  %570 = vrot.lane.b32.xlu0 %v127, 100
  %v571 = vpop.permute.xlu0 %570
  %572 = vrot.lane.b32.xlu0 %v130, 100
  %v573 = vpop.permute.xlu0 %572
  %576 = vrot.lane.b32.xlu0 %v133, 104
  %v577 = vpop.permute.xlu0 %576
  %578 = vrot.lane.b32.xlu0 %v136, 104
  %v579 = vpop.permute.xlu0 %578
  %582 = vrot.lane.b32.xlu0 %v139, 108
  %v583 = vpop.permute.xlu0 %582
  %584 = vrot.lane.b32.xlu0 %v142, 108
  %v585 = vpop.permute.xlu0 %584
  %v588 = vsel %vm168, %v565, %v571
  %v589 = vsel %vm168, %v567, %v573
  %v590 = vsel %vm171, %v588, %v577
  %v591 = vsel %vm171, %v589, %v579
  %v592 = vsel %vm174, %v590, %v583
  %v593 = vsel %vm174, %v591, %v585
  %v595 = vsel %vm78, %v44, 0
  %597 = vmatpush.msra.mxu0 0.0
  %598 = vmatpush.msra.mxu0 0.0
  %599 = vmatpush.msra.mxu0 0.0
  %600 = vmatpush.msra.mxu0 0.0
  %601 = vmatpush.msra.mxu0 0.0
  %602 = vmatpush.msra.mxu0 0.0
  %603 = vmatpush.msra.mxu0 0.0
  %604 = vmatpush.msra.mxu0 0.0
  %605 = vmatpush.msra.mxu0 0.0
  %606 = vmatpush.msra.mxu0 0.0
  %607 = vmatpush.msra.mxu0 0.0
  %608 = vmatpush.msra.mxu0 0.0
  %609 = vmatpush.msra.mxu0 0.0
  %610 = vmatpush.msra.mxu0 0.0
  %611 = vmatpush.msra.mxu0 %v593
  %612 = vmatpush.msra.mxu0 %v592
  %613 = vmatmul.f32.gmra.mxu0 %v595
  %v614 = vpop.f32.mrf.mxu0
  %v615 = vadd.f32 0.0, %v614
  %616 = vdwg.mxu0
  %617 = vst.msk [vmem:[%s4 + $0x20] sm:$0xf] %vm200, %v615
  %618 = vrot.lane.b32.xlu0 %v121, 92
  %v619 = vpop.permute.xlu0 %618
  %620 = vrot.lane.b32.xlu0 %v124, 92
  %v621 = vpop.permute.xlu0 %620
  %624 = vrot.lane.b32.xlu0 %v127, 96
  %v625 = vpop.permute.xlu0 %624
  %626 = vrot.lane.b32.xlu0 %v130, 96
  %v627 = vpop.permute.xlu0 %626
  %630 = vrot.lane.b32.xlu0 %v133, 100
  %v631 = vpop.permute.xlu0 %630
  %632 = vrot.lane.b32.xlu0 %v136, 100
  %v633 = vpop.permute.xlu0 %632
  %636 = vrot.lane.b32.xlu0 %v139, 104
  %v637 = vpop.permute.xlu0 %636
  %638 = vrot.lane.b32.xlu0 %v142, 104
  %v639 = vpop.permute.xlu0 %638
  %v642 = vsel %vm168, %v619, %v625
  %v643 = vsel %vm168, %v621, %v627
  %v644 = vsel %vm171, %v642, %v631
  %v645 = vsel %vm171, %v643, %v633
  %v646 = vsel %vm174, %v644, %v637
  %v647 = vsel %vm174, %v645, %v639
  %v649 = vsel %vm78, %v45, 0
  %651 = vmatpush.msra.mxu0 0.0
  %652 = vmatpush.msra.mxu0 0.0
  %653 = vmatpush.msra.mxu0 0.0
  %654 = vmatpush.msra.mxu0 0.0
  %655 = vmatpush.msra.mxu0 0.0
  %656 = vmatpush.msra.mxu0 0.0
  %657 = vmatpush.msra.mxu0 0.0
  %658 = vmatpush.msra.mxu0 0.0
  %659 = vmatpush.msra.mxu0 0.0
  %660 = vmatpush.msra.mxu0 0.0
  %661 = vmatpush.msra.mxu0 0.0
  %662 = vmatpush.msra.mxu0 0.0
  %663 = vmatpush.msra.mxu0 0.0
  %664 = vmatpush.msra.mxu0 0.0
  %665 = vmatpush.msra.mxu0 %v647
  %666 = vmatpush.msra.mxu0 %v646
  %667 = vmatmul.f32.gmra.mxu0 %v649
  %v668 = vpop.f32.mrf.mxu0
  %v669 = vadd.f32 0.0, %v668
  %670 = vdwg.mxu0
  %671 = vst.msk [vmem:[%s4 + $0x24] sm:$0xf] %vm200, %v669
  %672 = vrot.lane.b32.xlu0 %v121, 88
  %v673 = vpop.permute.xlu0 %672
  %674 = vrot.lane.b32.xlu0 %v124, 88
  %v675 = vpop.permute.xlu0 %674
  %678 = vrot.lane.b32.xlu0 %v127, 92
  %v679 = vpop.permute.xlu0 %678
  %680 = vrot.lane.b32.xlu0 %v130, 92
  %v681 = vpop.permute.xlu0 %680
  %684 = vrot.lane.b32.xlu0 %v133, 96
  %v685 = vpop.permute.xlu0 %684
  %686 = vrot.lane.b32.xlu0 %v136, 96
  %v687 = vpop.permute.xlu0 %686
  %690 = vrot.lane.b32.xlu0 %v139, 100
  %v691 = vpop.permute.xlu0 %690
  %692 = vrot.lane.b32.xlu0 %v142, 100
  %v693 = vpop.permute.xlu0 %692
  %v696 = vsel %vm168, %v673, %v679
  %v697 = vsel %vm168, %v675, %v681
  %v698 = vsel %vm171, %v696, %v685
  %v699 = vsel %vm171, %v697, %v687
  %v700 = vsel %vm174, %v698, %v691
  %v701 = vsel %vm174, %v699, %v693
  %v703 = vsel %vm78, %v46, 0
  %705 = vmatpush.msra.mxu0 0.0
  %706 = vmatpush.msra.mxu0 0.0
  %707 = vmatpush.msra.mxu0 0.0
  %708 = vmatpush.msra.mxu0 0.0
  %709 = vmatpush.msra.mxu0 0.0
  %710 = vmatpush.msra.mxu0 0.0
  %711 = vmatpush.msra.mxu0 0.0
  %712 = vmatpush.msra.mxu0 0.0
  %713 = vmatpush.msra.mxu0 0.0
  %714 = vmatpush.msra.mxu0 0.0
  %715 = vmatpush.msra.mxu0 0.0
  %716 = vmatpush.msra.mxu0 0.0
  %717 = vmatpush.msra.mxu0 0.0
  %718 = vmatpush.msra.mxu0 0.0
  %719 = vmatpush.msra.mxu0 %v701
  %720 = vmatpush.msra.mxu0 %v700
  %721 = vmatmul.f32.gmra.mxu0 %v703
  %v722 = vpop.f32.mrf.mxu0
  %v723 = vadd.f32 0.0, %v722
  %724 = vdwg.mxu0
  %725 = vst.msk [vmem:[%s4 + $0x28] sm:$0xf] %vm200, %v723
  %726 = vrot.lane.b32.xlu0 %v121, 84
  %v727 = vpop.permute.xlu0 %726
  %728 = vrot.lane.b32.xlu0 %v124, 84
  %v729 = vpop.permute.xlu0 %728
  %732 = vrot.lane.b32.xlu0 %v127, 88
  %v733 = vpop.permute.xlu0 %732
  %734 = vrot.lane.b32.xlu0 %v130, 88
  %v735 = vpop.permute.xlu0 %734
  %738 = vrot.lane.b32.xlu0 %v133, 92
  %v739 = vpop.permute.xlu0 %738
  %740 = vrot.lane.b32.xlu0 %v136, 92
  %v741 = vpop.permute.xlu0 %740
  %744 = vrot.lane.b32.xlu0 %v139, 96
  %v745 = vpop.permute.xlu0 %744
  %746 = vrot.lane.b32.xlu0 %v142, 96
  %v747 = vpop.permute.xlu0 %746
  %v750 = vsel %vm168, %v727, %v733
  %v751 = vsel %vm168, %v729, %v735
  %v752 = vsel %vm171, %v750, %v739
  %v753 = vsel %vm171, %v751, %v741
  %v754 = vsel %vm174, %v752, %v745
  %v755 = vsel %vm174, %v753, %v747
  %v757 = vsel %vm78, %v47, 0
  %759 = vmatpush.msra.mxu0 0.0
  %760 = vmatpush.msra.mxu0 0.0
  %761 = vmatpush.msra.mxu0 0.0
  %762 = vmatpush.msra.mxu0 0.0
  %763 = vmatpush.msra.mxu0 0.0
  %764 = vmatpush.msra.mxu0 0.0
  %765 = vmatpush.msra.mxu0 0.0
  %766 = vmatpush.msra.mxu0 0.0
  %767 = vmatpush.msra.mxu0 0.0
  %768 = vmatpush.msra.mxu0 0.0
  %769 = vmatpush.msra.mxu0 0.0
  %770 = vmatpush.msra.mxu0 0.0
  %771 = vmatpush.msra.mxu0 0.0
  %772 = vmatpush.msra.mxu0 0.0
  %773 = vmatpush.msra.mxu0 %v755
  %774 = vmatpush.msra.mxu0 %v754
  %775 = vmatmul.f32.gmra.mxu0 %v757
  %v776 = vpop.f32.mrf.mxu0
  %v777 = vadd.f32 0.0, %v776
  %778 = vdwg.mxu0
  %779 = vst.msk [vmem:[%s4 + $0x2c] sm:$0xf] %vm200, %v777
  %780 = vrot.lane.b32.xlu0 %v121, 80
  %v781 = vpop.permute.xlu0 %780
  %782 = vrot.lane.b32.xlu0 %v124, 80
  %v783 = vpop.permute.xlu0 %782
  %786 = vrot.lane.b32.xlu0 %v127, 84
  %v787 = vpop.permute.xlu0 %786
  %788 = vrot.lane.b32.xlu0 %v130, 84
  %v789 = vpop.permute.xlu0 %788
  %792 = vrot.lane.b32.xlu0 %v133, 88
  %v793 = vpop.permute.xlu0 %792
  %794 = vrot.lane.b32.xlu0 %v136, 88
  %v795 = vpop.permute.xlu0 %794
  %798 = vrot.lane.b32.xlu0 %v139, 92
  %v799 = vpop.permute.xlu0 %798
  %800 = vrot.lane.b32.xlu0 %v142, 92
  %v801 = vpop.permute.xlu0 %800
  %v804 = vsel %vm168, %v781, %v787
  %v805 = vsel %vm168, %v783, %v789
  %v806 = vsel %vm171, %v804, %v793
  %v807 = vsel %vm171, %v805, %v795
  %v808 = vsel %vm174, %v806, %v799
  %v809 = vsel %vm174, %v807, %v801
  %v811 = vsel %vm78, %v48, 0
  %813 = vmatpush.msra.mxu0 0.0
  %814 = vmatpush.msra.mxu0 0.0
  %815 = vmatpush.msra.mxu0 0.0
  %816 = vmatpush.msra.mxu0 0.0
  %817 = vmatpush.msra.mxu0 0.0
  %818 = vmatpush.msra.mxu0 0.0
  %819 = vmatpush.msra.mxu0 0.0
  %820 = vmatpush.msra.mxu0 0.0
  %821 = vmatpush.msra.mxu0 0.0
  %822 = vmatpush.msra.mxu0 0.0
  %823 = vmatpush.msra.mxu0 0.0
  %824 = vmatpush.msra.mxu0 0.0
  %825 = vmatpush.msra.mxu0 0.0
  %826 = vmatpush.msra.mxu0 0.0
  %827 = vmatpush.msra.mxu0 %v809
  %828 = vmatpush.msra.mxu0 %v808
  %829 = vmatmul.f32.gmra.mxu0 %v811
  %v830 = vpop.f32.mrf.mxu0
  %v831 = vadd.f32 0.0, %v830
  %832 = vdwg.mxu0
  %833 = vst.msk [vmem:[%s4 + $0x30] sm:$0xf] %vm200, %v831
  %834 = vrot.lane.b32.xlu0 %v121, 76
  %v835 = vpop.permute.xlu0 %834
  %836 = vrot.lane.b32.xlu0 %v124, 76
  %v837 = vpop.permute.xlu0 %836
  %840 = vrot.lane.b32.xlu0 %v127, 80
  %v841 = vpop.permute.xlu0 %840
  %842 = vrot.lane.b32.xlu0 %v130, 80
  %v843 = vpop.permute.xlu0 %842
  %846 = vrot.lane.b32.xlu0 %v133, 84
  %v847 = vpop.permute.xlu0 %846
  %848 = vrot.lane.b32.xlu0 %v136, 84
  %v849 = vpop.permute.xlu0 %848
  %852 = vrot.lane.b32.xlu0 %v139, 88
  %v853 = vpop.permute.xlu0 %852
  %854 = vrot.lane.b32.xlu0 %v142, 88
  %v855 = vpop.permute.xlu0 %854
  %v858 = vsel %vm168, %v835, %v841
  %v859 = vsel %vm168, %v837, %v843
  %v860 = vsel %vm171, %v858, %v847
  %v861 = vsel %vm171, %v859, %v849
  %v862 = vsel %vm174, %v860, %v853
  %v863 = vsel %vm174, %v861, %v855
  %v865 = vsel %vm78, %v49, 0
  %867 = vmatpush.msra.mxu0 0.0
  %868 = vmatpush.msra.mxu0 0.0
  %869 = vmatpush.msra.mxu0 0.0
  %870 = vmatpush.msra.mxu0 0.0
  %871 = vmatpush.msra.mxu0 0.0
  %872 = vmatpush.msra.mxu0 0.0
  %873 = vmatpush.msra.mxu0 0.0
  %874 = vmatpush.msra.mxu0 0.0
  %875 = vmatpush.msra.mxu0 0.0
  %876 = vmatpush.msra.mxu0 0.0
  %877 = vmatpush.msra.mxu0 0.0
  %878 = vmatpush.msra.mxu0 0.0
  %879 = vmatpush.msra.mxu0 0.0
  %880 = vmatpush.msra.mxu0 0.0
  %881 = vmatpush.msra.mxu0 %v863
  %882 = vmatpush.msra.mxu0 %v862
  %883 = vmatmul.f32.gmra.mxu0 %v865
  %v884 = vpop.f32.mrf.mxu0
  %v885 = vadd.f32 0.0, %v884
  %886 = vdwg.mxu0
  %887 = vst.msk [vmem:[%s4 + $0x34] sm:$0xf] %vm200, %v885
  %888 = vrot.lane.b32.xlu0 %v121, 72
  %v889 = vpop.permute.xlu0 %888
  %890 = vrot.lane.b32.xlu0 %v124, 72
  %v891 = vpop.permute.xlu0 %890
  %894 = vrot.lane.b32.xlu0 %v127, 76
  %v895 = vpop.permute.xlu0 %894
  %896 = vrot.lane.b32.xlu0 %v130, 76
  %v897 = vpop.permute.xlu0 %896
  %900 = vrot.lane.b32.xlu0 %v133, 80
  %v901 = vpop.permute.xlu0 %900
  %902 = vrot.lane.b32.xlu0 %v136, 80
  %v903 = vpop.permute.xlu0 %902
  %906 = vrot.lane.b32.xlu0 %v139, 84
  %v907 = vpop.permute.xlu0 %906
  %908 = vrot.lane.b32.xlu0 %v142, 84
  %v909 = vpop.permute.xlu0 %908
  %v912 = vsel %vm168, %v889, %v895
  %v913 = vsel %vm168, %v891, %v897
  %v914 = vsel %vm171, %v912, %v901
  %v915 = vsel %vm171, %v913, %v903
  %v916 = vsel %vm174, %v914, %v907
  %v917 = vsel %vm174, %v915, %v909
  %v919 = vsel %vm78, %v50, 0
  %921 = vmatpush.msra.mxu0 0.0
  %922 = vmatpush.msra.mxu0 0.0
  %923 = vmatpush.msra.mxu0 0.0
  %924 = vmatpush.msra.mxu0 0.0
  %925 = vmatpush.msra.mxu0 0.0
  %926 = vmatpush.msra.mxu0 0.0
  %927 = vmatpush.msra.mxu0 0.0
  %928 = vmatpush.msra.mxu0 0.0
  %929 = vmatpush.msra.mxu0 0.0
  %930 = vmatpush.msra.mxu0 0.0
  %931 = vmatpush.msra.mxu0 0.0
  %932 = vmatpush.msra.mxu0 0.0
  %933 = vmatpush.msra.mxu0 0.0
  %934 = vmatpush.msra.mxu0 0.0
  %935 = vmatpush.msra.mxu0 %v917
  %936 = vmatpush.msra.mxu0 %v916
  %937 = vmatmul.f32.gmra.mxu0 %v919
  %v938 = vpop.f32.mrf.mxu0
  %v939 = vadd.f32 0.0, %v938
  %940 = vdwg.mxu0
  %941 = vst.msk [vmem:[%s4 + $0x38] sm:$0xf] %vm200, %v939
  %942 = vrot.lane.b32.xlu0 %v121, 68
  %v943 = vpop.permute.xlu0 %942
  %944 = vrot.lane.b32.xlu0 %v124, 68
  %v945 = vpop.permute.xlu0 %944
  %948 = vrot.lane.b32.xlu0 %v127, 72
  %v949 = vpop.permute.xlu0 %948
  %950 = vrot.lane.b32.xlu0 %v130, 72
  %v951 = vpop.permute.xlu0 %950
  %954 = vrot.lane.b32.xlu0 %v133, 76
  %v955 = vpop.permute.xlu0 %954
  %956 = vrot.lane.b32.xlu0 %v136, 76
  %v957 = vpop.permute.xlu0 %956
  %960 = vrot.lane.b32.xlu0 %v139, 80
  %v961 = vpop.permute.xlu0 %960
  %962 = vrot.lane.b32.xlu0 %v142, 80
  %v963 = vpop.permute.xlu0 %962
  %v966 = vsel %vm168, %v943, %v949
  %v967 = vsel %vm168, %v945, %v951
  %v968 = vsel %vm171, %v966, %v955
  %v969 = vsel %vm171, %v967, %v957
  %v970 = vsel %vm174, %v968, %v961
  %v971 = vsel %vm174, %v969, %v963
  %v973 = vsel %vm78, %v51, 0
  %975 = vmatpush.msra.mxu0 0.0
  %976 = vmatpush.msra.mxu0 0.0
  %977 = vmatpush.msra.mxu0 0.0
  %978 = vmatpush.msra.mxu0 0.0
  %979 = vmatpush.msra.mxu0 0.0
  %980 = vmatpush.msra.mxu0 0.0
  %981 = vmatpush.msra.mxu0 0.0
  %982 = vmatpush.msra.mxu0 0.0
  %983 = vmatpush.msra.mxu0 0.0
  %984 = vmatpush.msra.mxu0 0.0
  %985 = vmatpush.msra.mxu0 0.0
  %986 = vmatpush.msra.mxu0 0.0
  %987 = vmatpush.msra.mxu0 0.0
  %988 = vmatpush.msra.mxu0 0.0
  %989 = vmatpush.msra.mxu0 %v971
  %990 = vmatpush.msra.mxu0 %v970
  %991 = vmatmul.f32.gmra.mxu0 %v973
  %v992 = vpop.f32.mrf.mxu0
  %v993 = vadd.f32 0.0, %v992
  %994 = vdwg.mxu0
  %995 = vst.msk [vmem:[%s4 + $0x3c] sm:$0xf] %vm200, %v993
  %996 = vrot.lane.b32.xlu0 %v121, 64
  %v997 = vpop.permute.xlu0 %996
  %998 = vrot.lane.b32.xlu0 %v124, 64
  %v999 = vpop.permute.xlu0 %998
  %1002 = vrot.lane.b32.xlu0 %v127, 68
  %v1003 = vpop.permute.xlu0 %1002
  %1004 = vrot.lane.b32.xlu0 %v130, 68
  %v1005 = vpop.permute.xlu0 %1004
  %1008 = vrot.lane.b32.xlu0 %v133, 72
  %v1009 = vpop.permute.xlu0 %1008
  %1010 = vrot.lane.b32.xlu0 %v136, 72
  %v1011 = vpop.permute.xlu0 %1010
  %1014 = vrot.lane.b32.xlu0 %v139, 76
  %v1015 = vpop.permute.xlu0 %1014
  %1016 = vrot.lane.b32.xlu0 %v142, 76
  %v1017 = vpop.permute.xlu0 %1016
  %v1020 = vsel %vm168, %v997, %v1003
  %v1021 = vsel %vm168, %v999, %v1005
  %v1022 = vsel %vm171, %v1020, %v1009
  %v1023 = vsel %vm171, %v1021, %v1011
  %v1024 = vsel %vm174, %v1022, %v1015
  %v1025 = vsel %vm174, %v1023, %v1017
  %v1027 = vsel %vm78, %v52, 0
  %1029 = vmatpush.msra.mxu0 0.0
  %1030 = vmatpush.msra.mxu0 0.0
  %1031 = vmatpush.msra.mxu0 0.0
  %1032 = vmatpush.msra.mxu0 0.0
  %1033 = vmatpush.msra.mxu0 0.0
  %1034 = vmatpush.msra.mxu0 0.0
  %1035 = vmatpush.msra.mxu0 0.0
  %1036 = vmatpush.msra.mxu0 0.0
  %1037 = vmatpush.msra.mxu0 0.0
  %1038 = vmatpush.msra.mxu0 0.0
  %1039 = vmatpush.msra.mxu0 0.0
  %1040 = vmatpush.msra.mxu0 0.0
  %1041 = vmatpush.msra.mxu0 0.0
  %1042 = vmatpush.msra.mxu0 0.0
  %1043 = vmatpush.msra.mxu0 %v1025
  %1044 = vmatpush.msra.mxu0 %v1024
  %1045 = vmatmul.f32.gmra.mxu0 %v1027
  %v1046 = vpop.f32.mrf.mxu0
  %v1047 = vadd.f32 0.0, %v1046
  %1048 = vdwg.mxu0
  %1049 = vst.msk [vmem:[%s4 + $0x40] sm:$0xf] %vm200, %v1047
  %1050 = vrot.lane.b32.xlu0 %v121, 60
  %v1051 = vpop.permute.xlu0 %1050
  %1052 = vrot.lane.b32.xlu0 %v124, 60
  %v1053 = vpop.permute.xlu0 %1052
  %1056 = vrot.lane.b32.xlu0 %v127, 64
  %v1057 = vpop.permute.xlu0 %1056
  %1058 = vrot.lane.b32.xlu0 %v130, 64
  %v1059 = vpop.permute.xlu0 %1058
  %1062 = vrot.lane.b32.xlu0 %v133, 68
  %v1063 = vpop.permute.xlu0 %1062
  %1064 = vrot.lane.b32.xlu0 %v136, 68
  %v1065 = vpop.permute.xlu0 %1064
  %1068 = vrot.lane.b32.xlu0 %v139, 72
  %v1069 = vpop.permute.xlu0 %1068
  %1070 = vrot.lane.b32.xlu0 %v142, 72
  %v1071 = vpop.permute.xlu0 %1070
  %v1074 = vsel %vm168, %v1051, %v1057
  %v1075 = vsel %vm168, %v1053, %v1059
  %v1076 = vsel %vm171, %v1074, %v1063
  %v1077 = vsel %vm171, %v1075, %v1065
  %v1078 = vsel %vm174, %v1076, %v1069
  %v1079 = vsel %vm174, %v1077, %v1071
  %v1081 = vsel %vm78, %v53, 0
  %1083 = vmatpush.msra.mxu0 0.0
  %1084 = vmatpush.msra.mxu0 0.0
  %1085 = vmatpush.msra.mxu0 0.0
  %1086 = vmatpush.msra.mxu0 0.0
  %1087 = vmatpush.msra.mxu0 0.0
  %1088 = vmatpush.msra.mxu0 0.0
  %1089 = vmatpush.msra.mxu0 0.0
  %1090 = vmatpush.msra.mxu0 0.0
  %1091 = vmatpush.msra.mxu0 0.0
  %1092 = vmatpush.msra.mxu0 0.0
  %1093 = vmatpush.msra.mxu0 0.0
  %1094 = vmatpush.msra.mxu0 0.0
  %1095 = vmatpush.msra.mxu0 0.0
  %1096 = vmatpush.msra.mxu0 0.0
  %1097 = vmatpush.msra.mxu0 %v1079
  %1098 = vmatpush.msra.mxu0 %v1078
  %1099 = vmatmul.f32.gmra.mxu0 %v1081
  %v1100 = vpop.f32.mrf.mxu0
  %v1101 = vadd.f32 0.0, %v1100
  %1102 = vdwg.mxu0
  %1103 = vst.msk [vmem:[%s4 + $0x44] sm:$0xf] %vm200, %v1101
  %1104 = vrot.lane.b32.xlu0 %v121, 56
  %v1105 = vpop.permute.xlu0 %1104
  %1106 = vrot.lane.b32.xlu0 %v124, 56
  %v1107 = vpop.permute.xlu0 %1106
  %1110 = vrot.lane.b32.xlu0 %v127, 60
  %v1111 = vpop.permute.xlu0 %1110
  %1112 = vrot.lane.b32.xlu0 %v130, 60
  %v1113 = vpop.permute.xlu0 %1112
  %1116 = vrot.lane.b32.xlu0 %v133, 64
  %v1117 = vpop.permute.xlu0 %1116
  %1118 = vrot.lane.b32.xlu0 %v136, 64
  %v1119 = vpop.permute.xlu0 %1118
  %1122 = vrot.lane.b32.xlu0 %v139, 68
  %v1123 = vpop.permute.xlu0 %1122
  %1124 = vrot.lane.b32.xlu0 %v142, 68
  %v1125 = vpop.permute.xlu0 %1124
  %v1128 = vsel %vm168, %v1105, %v1111
  %v1129 = vsel %vm168, %v1107, %v1113
  %v1130 = vsel %vm171, %v1128, %v1117
  %v1131 = vsel %vm171, %v1129, %v1119
  %v1132 = vsel %vm174, %v1130, %v1123
  %v1133 = vsel %vm174, %v1131, %v1125
  %v1135 = vsel %vm78, %v54, 0
  %1137 = vmatpush.msra.mxu0 0.0
  %1138 = vmatpush.msra.mxu0 0.0
  %1139 = vmatpush.msra.mxu0 0.0
  %1140 = vmatpush.msra.mxu0 0.0
  %1141 = vmatpush.msra.mxu0 0.0
  %1142 = vmatpush.msra.mxu0 0.0
  %1143 = vmatpush.msra.mxu0 0.0
  %1144 = vmatpush.msra.mxu0 0.0
  %1145 = vmatpush.msra.mxu0 0.0
  %1146 = vmatpush.msra.mxu0 0.0
  %1147 = vmatpush.msra.mxu0 0.0
  %1148 = vmatpush.msra.mxu0 0.0
  %1149 = vmatpush.msra.mxu0 0.0
  %1150 = vmatpush.msra.mxu0 0.0
  %1151 = vmatpush.msra.mxu0 %v1133
  %1152 = vmatpush.msra.mxu0 %v1132
  %1153 = vmatmul.f32.gmra.mxu0 %v1135
  %v1154 = vpop.f32.mrf.mxu0
  %v1155 = vadd.f32 0.0, %v1154
  %1156 = vdwg.mxu0
  %1157 = vst.msk [vmem:[%s4 + $0x48] sm:$0xf] %vm200, %v1155
  %1158 = vrot.lane.b32.xlu0 %v121, 52
  %v1159 = vpop.permute.xlu0 %1158
  %1160 = vrot.lane.b32.xlu0 %v124, 52
  %v1161 = vpop.permute.xlu0 %1160
  %1164 = vrot.lane.b32.xlu0 %v127, 56
  %v1165 = vpop.permute.xlu0 %1164
  %1166 = vrot.lane.b32.xlu0 %v130, 56
  %v1167 = vpop.permute.xlu0 %1166
  %1170 = vrot.lane.b32.xlu0 %v133, 60
  %v1171 = vpop.permute.xlu0 %1170
  %1172 = vrot.lane.b32.xlu0 %v136, 60
  %v1173 = vpop.permute.xlu0 %1172
  %1176 = vrot.lane.b32.xlu0 %v139, 64
  %v1177 = vpop.permute.xlu0 %1176
  %1178 = vrot.lane.b32.xlu0 %v142, 64
  %v1179 = vpop.permute.xlu0 %1178
  %v1182 = vsel %vm168, %v1159, %v1165
  %v1183 = vsel %vm168, %v1161, %v1167
  %v1184 = vsel %vm171, %v1182, %v1171
  %v1185 = vsel %vm171, %v1183, %v1173
  %v1186 = vsel %vm174, %v1184, %v1177
  %v1187 = vsel %vm174, %v1185, %v1179
  %v1189 = vsel %vm78, %v55, 0
  %1191 = vmatpush.msra.mxu0 0.0
  %1192 = vmatpush.msra.mxu0 0.0
  %1193 = vmatpush.msra.mxu0 0.0
  %1194 = vmatpush.msra.mxu0 0.0
  %1195 = vmatpush.msra.mxu0 0.0
  %1196 = vmatpush.msra.mxu0 0.0
  %1197 = vmatpush.msra.mxu0 0.0
  %1198 = vmatpush.msra.mxu0 0.0
  %1199 = vmatpush.msra.mxu0 0.0
  %1200 = vmatpush.msra.mxu0 0.0
  %1201 = vmatpush.msra.mxu0 0.0
  %1202 = vmatpush.msra.mxu0 0.0
  %1203 = vmatpush.msra.mxu0 0.0
  %1204 = vmatpush.msra.mxu0 0.0
  %1205 = vmatpush.msra.mxu0 %v1187
  %1206 = vmatpush.msra.mxu0 %v1186
  %1207 = vmatmul.f32.gmra.mxu0 %v1189
  %v1208 = vpop.f32.mrf.mxu0
  %v1209 = vadd.f32 0.0, %v1208
  %1210 = vdwg.mxu0
  %1211 = vst.msk [vmem:[%s4 + $0x4c] sm:$0xf] %vm200, %v1209
  %1212 = vrot.lane.b32.xlu0 %v121, 48
  %v1213 = vpop.permute.xlu0 %1212
  %1214 = vrot.lane.b32.xlu0 %v124, 48
  %v1215 = vpop.permute.xlu0 %1214
  %1218 = vrot.lane.b32.xlu0 %v127, 52
  %v1219 = vpop.permute.xlu0 %1218
  %1220 = vrot.lane.b32.xlu0 %v130, 52
  %v1221 = vpop.permute.xlu0 %1220
  %1224 = vrot.lane.b32.xlu0 %v133, 56
  %v1225 = vpop.permute.xlu0 %1224
  %1226 = vrot.lane.b32.xlu0 %v136, 56
  %v1227 = vpop.permute.xlu0 %1226
  %1230 = vrot.lane.b32.xlu0 %v139, 60
  %v1231 = vpop.permute.xlu0 %1230
  %1232 = vrot.lane.b32.xlu0 %v142, 60
  %v1233 = vpop.permute.xlu0 %1232
  %v1236 = vsel %vm168, %v1213, %v1219
  %v1237 = vsel %vm168, %v1215, %v1221
  %v1238 = vsel %vm171, %v1236, %v1225
  %v1239 = vsel %vm171, %v1237, %v1227
  %v1240 = vsel %vm174, %v1238, %v1231
  %v1241 = vsel %vm174, %v1239, %v1233
  %v1243 = vsel %vm78, %v56, 0
  %1245 = vmatpush.msra.mxu0 0.0
  %1246 = vmatpush.msra.mxu0 0.0
  %1247 = vmatpush.msra.mxu0 0.0
  %1248 = vmatpush.msra.mxu0 0.0
  %1249 = vmatpush.msra.mxu0 0.0
  %1250 = vmatpush.msra.mxu0 0.0
  %1251 = vmatpush.msra.mxu0 0.0
  %1252 = vmatpush.msra.mxu0 0.0
  %1253 = vmatpush.msra.mxu0 0.0
  %1254 = vmatpush.msra.mxu0 0.0
  %1255 = vmatpush.msra.mxu0 0.0
  %1256 = vmatpush.msra.mxu0 0.0
  %1257 = vmatpush.msra.mxu0 0.0
  %1258 = vmatpush.msra.mxu0 0.0
  %1259 = vmatpush.msra.mxu0 %v1241
  %1260 = vmatpush.msra.mxu0 %v1240
  %1261 = vmatmul.f32.gmra.mxu0 %v1243
  %v1262 = vpop.f32.mrf.mxu0
  %v1263 = vadd.f32 0.0, %v1262
  %1264 = vdwg.mxu0
  %1265 = vst.msk [vmem:[%s4 + $0x50] sm:$0xf] %vm200, %v1263
  %1266 = vrot.lane.b32.xlu0 %v121, 44
  %v1267 = vpop.permute.xlu0 %1266
  %1268 = vrot.lane.b32.xlu0 %v124, 44
  %v1269 = vpop.permute.xlu0 %1268
  %1272 = vrot.lane.b32.xlu0 %v127, 48
  %v1273 = vpop.permute.xlu0 %1272
  %1274 = vrot.lane.b32.xlu0 %v130, 48
  %v1275 = vpop.permute.xlu0 %1274
  %1278 = vrot.lane.b32.xlu0 %v133, 52
  %v1279 = vpop.permute.xlu0 %1278
  %1280 = vrot.lane.b32.xlu0 %v136, 52
  %v1281 = vpop.permute.xlu0 %1280
  %1284 = vrot.lane.b32.xlu0 %v139, 56
  %v1285 = vpop.permute.xlu0 %1284
  %1286 = vrot.lane.b32.xlu0 %v142, 56
  %v1287 = vpop.permute.xlu0 %1286
  %v1290 = vsel %vm168, %v1267, %v1273
  %v1291 = vsel %vm168, %v1269, %v1275
  %v1292 = vsel %vm171, %v1290, %v1279
  %v1293 = vsel %vm171, %v1291, %v1281
  %v1294 = vsel %vm174, %v1292, %v1285
  %v1295 = vsel %vm174, %v1293, %v1287
  %v1297 = vsel %vm78, %v57, 0
  %1299 = vmatpush.msra.mxu0 0.0
  %1300 = vmatpush.msra.mxu0 0.0
  %1301 = vmatpush.msra.mxu0 0.0
  %1302 = vmatpush.msra.mxu0 0.0
  %1303 = vmatpush.msra.mxu0 0.0
  %1304 = vmatpush.msra.mxu0 0.0
  %1305 = vmatpush.msra.mxu0 0.0
  %1306 = vmatpush.msra.mxu0 0.0
  %1307 = vmatpush.msra.mxu0 0.0
  %1308 = vmatpush.msra.mxu0 0.0
  %1309 = vmatpush.msra.mxu0 0.0
  %1310 = vmatpush.msra.mxu0 0.0
  %1311 = vmatpush.msra.mxu0 0.0
  %1312 = vmatpush.msra.mxu0 0.0
  %1313 = vmatpush.msra.mxu0 %v1295
  %1314 = vmatpush.msra.mxu0 %v1294
  %1315 = vmatmul.f32.gmra.mxu0 %v1297
  %v1316 = vpop.f32.mrf.mxu0
  %v1317 = vadd.f32 0.0, %v1316
  %1318 = vdwg.mxu0
  %1319 = vst.msk [vmem:[%s4 + $0x54] sm:$0xf] %vm200, %v1317
  %1320 = vrot.lane.b32.xlu0 %v121, 40
  %v1321 = vpop.permute.xlu0 %1320
  %1322 = vrot.lane.b32.xlu0 %v124, 40
  %v1323 = vpop.permute.xlu0 %1322
  %1326 = vrot.lane.b32.xlu0 %v127, 44
  %v1327 = vpop.permute.xlu0 %1326
  %1328 = vrot.lane.b32.xlu0 %v130, 44
  %v1329 = vpop.permute.xlu0 %1328
  %1332 = vrot.lane.b32.xlu0 %v133, 48
  %v1333 = vpop.permute.xlu0 %1332
  %1334 = vrot.lane.b32.xlu0 %v136, 48
  %v1335 = vpop.permute.xlu0 %1334
  %1338 = vrot.lane.b32.xlu0 %v139, 52
  %v1339 = vpop.permute.xlu0 %1338
  %1340 = vrot.lane.b32.xlu0 %v142, 52
  %v1341 = vpop.permute.xlu0 %1340
  %v1344 = vsel %vm168, %v1321, %v1327
  %v1345 = vsel %vm168, %v1323, %v1329
  %v1346 = vsel %vm171, %v1344, %v1333
  %v1347 = vsel %vm171, %v1345, %v1335
  %v1348 = vsel %vm174, %v1346, %v1339
  %v1349 = vsel %vm174, %v1347, %v1341
  %v1351 = vsel %vm78, %v58, 0
  %1353 = vmatpush.msra.mxu0 0.0
  %1354 = vmatpush.msra.mxu0 0.0
  %1355 = vmatpush.msra.mxu0 0.0
  %1356 = vmatpush.msra.mxu0 0.0
  %1357 = vmatpush.msra.mxu0 0.0
  %1358 = vmatpush.msra.mxu0 0.0
  %1359 = vmatpush.msra.mxu0 0.0
  %1360 = vmatpush.msra.mxu0 0.0
  %1361 = vmatpush.msra.mxu0 0.0
  %1362 = vmatpush.msra.mxu0 0.0
  %1363 = vmatpush.msra.mxu0 0.0
  %1364 = vmatpush.msra.mxu0 0.0
  %1365 = vmatpush.msra.mxu0 0.0
  %1366 = vmatpush.msra.mxu0 0.0
  %1367 = vmatpush.msra.mxu0 %v1349
  %1368 = vmatpush.msra.mxu0 %v1348
  %1369 = vmatmul.f32.gmra.mxu0 %v1351
  %v1370 = vpop.f32.mrf.mxu0
  %v1371 = vadd.f32 0.0, %v1370
  %1372 = vdwg.mxu0
  %1373 = vst.msk [vmem:[%s4 + $0x58] sm:$0xf] %vm200, %v1371
  %1374 = vrot.lane.b32.xlu0 %v121, 36
  %v1375 = vpop.permute.xlu0 %1374
  %1376 = vrot.lane.b32.xlu0 %v124, 36
  %v1377 = vpop.permute.xlu0 %1376
  %1380 = vrot.lane.b32.xlu0 %v127, 40
  %v1381 = vpop.permute.xlu0 %1380
  %1382 = vrot.lane.b32.xlu0 %v130, 40
  %v1383 = vpop.permute.xlu0 %1382
  %1386 = vrot.lane.b32.xlu0 %v133, 44
  %v1387 = vpop.permute.xlu0 %1386
  %1388 = vrot.lane.b32.xlu0 %v136, 44
  %v1389 = vpop.permute.xlu0 %1388
  %1392 = vrot.lane.b32.xlu0 %v139, 48
  %v1393 = vpop.permute.xlu0 %1392
  %1394 = vrot.lane.b32.xlu0 %v142, 48
  %v1395 = vpop.permute.xlu0 %1394
  %v1398 = vsel %vm168, %v1375, %v1381
  %v1399 = vsel %vm168, %v1377, %v1383
  %v1400 = vsel %vm171, %v1398, %v1387
  %v1401 = vsel %vm171, %v1399, %v1389
  %v1402 = vsel %vm174, %v1400, %v1393
  %v1403 = vsel %vm174, %v1401, %v1395
  %v1405 = vsel %vm78, %v59, 0
  %1407 = vmatpush.msra.mxu0 0.0
  %1408 = vmatpush.msra.mxu0 0.0
  %1409 = vmatpush.msra.mxu0 0.0
  %1410 = vmatpush.msra.mxu0 0.0
  %1411 = vmatpush.msra.mxu0 0.0
  %1412 = vmatpush.msra.mxu0 0.0
  %1413 = vmatpush.msra.mxu0 0.0
  %1414 = vmatpush.msra.mxu0 0.0
  %1415 = vmatpush.msra.mxu0 0.0
  %1416 = vmatpush.msra.mxu0 0.0
  %1417 = vmatpush.msra.mxu0 0.0
  %1418 = vmatpush.msra.mxu0 0.0
  %1419 = vmatpush.msra.mxu0 0.0
  %1420 = vmatpush.msra.mxu0 0.0
  %1421 = vmatpush.msra.mxu0 %v1403
  %1422 = vmatpush.msra.mxu0 %v1402
  %1423 = vmatmul.f32.gmra.mxu0 %v1405
  %v1424 = vpop.f32.mrf.mxu0
  %v1425 = vadd.f32 0.0, %v1424
  %1426 = vdwg.mxu0
  %1427 = vst.msk [vmem:[%s4 + $0x5c] sm:$0xf] %vm200, %v1425
  %1428 = vrot.lane.b32.xlu0 %v121, 32
  %v1429 = vpop.permute.xlu0 %1428
  %1430 = vrot.lane.b32.xlu0 %v124, 32
  %v1431 = vpop.permute.xlu0 %1430
  %1434 = vrot.lane.b32.xlu0 %v127, 36
  %v1435 = vpop.permute.xlu0 %1434
  %1436 = vrot.lane.b32.xlu0 %v130, 36
  %v1437 = vpop.permute.xlu0 %1436
  %1440 = vrot.lane.b32.xlu0 %v133, 40
  %v1441 = vpop.permute.xlu0 %1440
  %1442 = vrot.lane.b32.xlu0 %v136, 40
  %v1443 = vpop.permute.xlu0 %1442
  %1446 = vrot.lane.b32.xlu0 %v139, 44
  %v1447 = vpop.permute.xlu0 %1446
  %1448 = vrot.lane.b32.xlu0 %v142, 44
  %v1449 = vpop.permute.xlu0 %1448
  %v1452 = vsel %vm168, %v1429, %v1435
  %v1453 = vsel %vm168, %v1431, %v1437
  %v1454 = vsel %vm171, %v1452, %v1441
  %v1455 = vsel %vm171, %v1453, %v1443
  %v1456 = vsel %vm174, %v1454, %v1447
  %v1457 = vsel %vm174, %v1455, %v1449
  %v1459 = vsel %vm78, %v60, 0
  %1461 = vmatpush.msra.mxu0 0.0
  %1462 = vmatpush.msra.mxu0 0.0
  %1463 = vmatpush.msra.mxu0 0.0
  %1464 = vmatpush.msra.mxu0 0.0
  %1465 = vmatpush.msra.mxu0 0.0
  %1466 = vmatpush.msra.mxu0 0.0
  %1467 = vmatpush.msra.mxu0 0.0
  %1468 = vmatpush.msra.mxu0 0.0
  %1469 = vmatpush.msra.mxu0 0.0
  %1470 = vmatpush.msra.mxu0 0.0
  %1471 = vmatpush.msra.mxu0 0.0
  %1472 = vmatpush.msra.mxu0 0.0
  %1473 = vmatpush.msra.mxu0 0.0
  %1474 = vmatpush.msra.mxu0 0.0
  %1475 = vmatpush.msra.mxu0 %v1457
  %1476 = vmatpush.msra.mxu0 %v1456
  %1477 = vmatmul.f32.gmra.mxu0 %v1459
  %v1478 = vpop.f32.mrf.mxu0
  %v1479 = vadd.f32 0.0, %v1478
  %1480 = vdwg.mxu0
  %1481 = vst.msk [vmem:[%s4 + $0x60] sm:$0xf] %vm200, %v1479
  %1482 = vrot.lane.b32.xlu0 %v121, 28
  %v1483 = vpop.permute.xlu0 %1482
  %1484 = vrot.lane.b32.xlu0 %v124, 28
  %v1485 = vpop.permute.xlu0 %1484
  %1488 = vrot.lane.b32.xlu0 %v127, 32
  %v1489 = vpop.permute.xlu0 %1488
  %1490 = vrot.lane.b32.xlu0 %v130, 32
  %v1491 = vpop.permute.xlu0 %1490
  %1494 = vrot.lane.b32.xlu0 %v133, 36
  %v1495 = vpop.permute.xlu0 %1494
  %1496 = vrot.lane.b32.xlu0 %v136, 36
  %v1497 = vpop.permute.xlu0 %1496
  %1500 = vrot.lane.b32.xlu0 %v139, 40
  %v1501 = vpop.permute.xlu0 %1500
  %1502 = vrot.lane.b32.xlu0 %v142, 40
  %v1503 = vpop.permute.xlu0 %1502
  %v1506 = vsel %vm168, %v1483, %v1489
  %v1507 = vsel %vm168, %v1485, %v1491
  %v1508 = vsel %vm171, %v1506, %v1495
  %v1509 = vsel %vm171, %v1507, %v1497
  %v1510 = vsel %vm174, %v1508, %v1501
  %v1511 = vsel %vm174, %v1509, %v1503
  %v1513 = vsel %vm78, %v61, 0
  %1515 = vmatpush.msra.mxu0 0.0
  %1516 = vmatpush.msra.mxu0 0.0
  %1517 = vmatpush.msra.mxu0 0.0
  %1518 = vmatpush.msra.mxu0 0.0
  %1519 = vmatpush.msra.mxu0 0.0
  %1520 = vmatpush.msra.mxu0 0.0
  %1521 = vmatpush.msra.mxu0 0.0
  %1522 = vmatpush.msra.mxu0 0.0
  %1523 = vmatpush.msra.mxu0 0.0
  %1524 = vmatpush.msra.mxu0 0.0
  %1525 = vmatpush.msra.mxu0 0.0
  %1526 = vmatpush.msra.mxu0 0.0
  %1527 = vmatpush.msra.mxu0 0.0
  %1528 = vmatpush.msra.mxu0 0.0
  %1529 = vmatpush.msra.mxu0 %v1511
  %1530 = vmatpush.msra.mxu0 %v1510
  %1531 = vmatmul.f32.gmra.mxu0 %v1513
  %v1532 = vpop.f32.mrf.mxu0
  %v1533 = vadd.f32 0.0, %v1532
  %1534 = vdwg.mxu0
  %1535 = vst.msk [vmem:[%s4 + $0x64] sm:$0xf] %vm200, %v1533
  %1536 = vrot.lane.b32.xlu0 %v121, 24
  %v1537 = vpop.permute.xlu0 %1536
  %1538 = vrot.lane.b32.xlu0 %v124, 24
  %v1539 = vpop.permute.xlu0 %1538
  %1542 = vrot.lane.b32.xlu0 %v127, 28
  %v1543 = vpop.permute.xlu0 %1542
  %1544 = vrot.lane.b32.xlu0 %v130, 28
  %v1545 = vpop.permute.xlu0 %1544
  %1548 = vrot.lane.b32.xlu0 %v133, 32
  %v1549 = vpop.permute.xlu0 %1548
  %1550 = vrot.lane.b32.xlu0 %v136, 32
  %v1551 = vpop.permute.xlu0 %1550
  %1554 = vrot.lane.b32.xlu0 %v139, 36
  %v1555 = vpop.permute.xlu0 %1554
  %1556 = vrot.lane.b32.xlu0 %v142, 36
  %v1557 = vpop.permute.xlu0 %1556
  %v1560 = vsel %vm168, %v1537, %v1543
  %v1561 = vsel %vm168, %v1539, %v1545
  %v1562 = vsel %vm171, %v1560, %v1549
  %v1563 = vsel %vm171, %v1561, %v1551
  %v1564 = vsel %vm174, %v1562, %v1555
  %v1565 = vsel %vm174, %v1563, %v1557
  %v1567 = vsel %vm78, %v62, 0
  %1569 = vmatpush.msra.mxu0 0.0
  %1570 = vmatpush.msra.mxu0 0.0
  %1571 = vmatpush.msra.mxu0 0.0
  %1572 = vmatpush.msra.mxu0 0.0
  %1573 = vmatpush.msra.mxu0 0.0
  %1574 = vmatpush.msra.mxu0 0.0
  %1575 = vmatpush.msra.mxu0 0.0
  %1576 = vmatpush.msra.mxu0 0.0
  %1577 = vmatpush.msra.mxu0 0.0
  %1578 = vmatpush.msra.mxu0 0.0
  %1579 = vmatpush.msra.mxu0 0.0
  %1580 = vmatpush.msra.mxu0 0.0
  %1581 = vmatpush.msra.mxu0 0.0
  %1582 = vmatpush.msra.mxu0 0.0
  %1583 = vmatpush.msra.mxu0 %v1565
  %1584 = vmatpush.msra.mxu0 %v1564
  %1585 = vmatmul.f32.gmra.mxu0 %v1567
  %v1586 = vpop.f32.mrf.mxu0
  %v1587 = vadd.f32 0.0, %v1586
  %1588 = vdwg.mxu0
  %1589 = vst.msk [vmem:[%s4 + $0x68] sm:$0xf] %vm200, %v1587
  %1590 = vrot.lane.b32.xlu0 %v121, 20
  %v1591 = vpop.permute.xlu0 %1590
  %1592 = vrot.lane.b32.xlu0 %v124, 20
  %v1593 = vpop.permute.xlu0 %1592
  %1596 = vrot.lane.b32.xlu0 %v127, 24
  %v1597 = vpop.permute.xlu0 %1596
  %1598 = vrot.lane.b32.xlu0 %v130, 24
  %v1599 = vpop.permute.xlu0 %1598
  %1602 = vrot.lane.b32.xlu0 %v133, 28
  %v1603 = vpop.permute.xlu0 %1602
  %1604 = vrot.lane.b32.xlu0 %v136, 28
  %v1605 = vpop.permute.xlu0 %1604
  %1608 = vrot.lane.b32.xlu0 %v139, 32
  %v1609 = vpop.permute.xlu0 %1608
  %1610 = vrot.lane.b32.xlu0 %v142, 32
  %v1611 = vpop.permute.xlu0 %1610
  %v1614 = vsel %vm168, %v1591, %v1597
  %v1615 = vsel %vm168, %v1593, %v1599
  %v1616 = vsel %vm171, %v1614, %v1603
  %v1617 = vsel %vm171, %v1615, %v1605
  %v1618 = vsel %vm174, %v1616, %v1609
  %v1619 = vsel %vm174, %v1617, %v1611
  %v1621 = vsel %vm78, %v63, 0
  %1623 = vmatpush.msra.mxu0 0.0
  %1624 = vmatpush.msra.mxu0 0.0
  %1625 = vmatpush.msra.mxu0 0.0
  %1626 = vmatpush.msra.mxu0 0.0
  %1627 = vmatpush.msra.mxu0 0.0
  %1628 = vmatpush.msra.mxu0 0.0
  %1629 = vmatpush.msra.mxu0 0.0
  %1630 = vmatpush.msra.mxu0 0.0
  %1631 = vmatpush.msra.mxu0 0.0
  %1632 = vmatpush.msra.mxu0 0.0
  %1633 = vmatpush.msra.mxu0 0.0
  %1634 = vmatpush.msra.mxu0 0.0
  %1635 = vmatpush.msra.mxu0 0.0
  %1636 = vmatpush.msra.mxu0 0.0
  %1637 = vmatpush.msra.mxu0 %v1619
  %1638 = vmatpush.msra.mxu0 %v1618
  %1639 = vmatmul.f32.gmra.mxu0 %v1621
  %v1640 = vpop.f32.mrf.mxu0
  %v1641 = vadd.f32 0.0, %v1640
  %1642 = vdwg.mxu0
  %1643 = vst.msk [vmem:[%s4 + $0x6c] sm:$0xf] %vm200, %v1641
  %1644 = vrot.lane.b32.xlu0 %v121, 16
  %v1645 = vpop.permute.xlu0 %1644
  %1646 = vrot.lane.b32.xlu0 %v124, 16
  %v1647 = vpop.permute.xlu0 %1646
  %1650 = vrot.lane.b32.xlu0 %v127, 20
  %v1651 = vpop.permute.xlu0 %1650
  %1652 = vrot.lane.b32.xlu0 %v130, 20
  %v1653 = vpop.permute.xlu0 %1652
  %1656 = vrot.lane.b32.xlu0 %v133, 24
  %v1657 = vpop.permute.xlu0 %1656
  %1658 = vrot.lane.b32.xlu0 %v136, 24
  %v1659 = vpop.permute.xlu0 %1658
  %1662 = vrot.lane.b32.xlu0 %v139, 28
  %v1663 = vpop.permute.xlu0 %1662
  %1664 = vrot.lane.b32.xlu0 %v142, 28
  %v1665 = vpop.permute.xlu0 %1664
  %v1668 = vsel %vm168, %v1645, %v1651
  %v1669 = vsel %vm168, %v1647, %v1653
  %v1670 = vsel %vm171, %v1668, %v1657
  %v1671 = vsel %vm171, %v1669, %v1659
  %v1672 = vsel %vm174, %v1670, %v1663
  %v1673 = vsel %vm174, %v1671, %v1665
  %v1675 = vsel %vm78, %v64, 0
  %1677 = vmatpush.msra.mxu0 0.0
  %1678 = vmatpush.msra.mxu0 0.0
  %1679 = vmatpush.msra.mxu0 0.0
  %1680 = vmatpush.msra.mxu0 0.0
  %1681 = vmatpush.msra.mxu0 0.0
  %1682 = vmatpush.msra.mxu0 0.0
  %1683 = vmatpush.msra.mxu0 0.0
  %1684 = vmatpush.msra.mxu0 0.0
  %1685 = vmatpush.msra.mxu0 0.0
  %1686 = vmatpush.msra.mxu0 0.0
  %1687 = vmatpush.msra.mxu0 0.0
  %1688 = vmatpush.msra.mxu0 0.0
  %1689 = vmatpush.msra.mxu0 0.0
  %1690 = vmatpush.msra.mxu0 0.0
  %1691 = vmatpush.msra.mxu0 %v1673
  %1692 = vmatpush.msra.mxu0 %v1672
  %1693 = vmatmul.f32.gmra.mxu0 %v1675
  %v1694 = vpop.f32.mrf.mxu0
  %v1695 = vadd.f32 0.0, %v1694
  %1696 = vdwg.mxu0
  %1697 = vst.msk [vmem:[%s4 + $0x70] sm:$0xf] %vm200, %v1695
  %1698 = vrot.lane.b32.xlu0 %v121, 12
  %v1699 = vpop.permute.xlu0 %1698
  %1700 = vrot.lane.b32.xlu0 %v124, 12
  %v1701 = vpop.permute.xlu0 %1700
  %1704 = vrot.lane.b32.xlu0 %v127, 16
  %v1705 = vpop.permute.xlu0 %1704
  %1706 = vrot.lane.b32.xlu0 %v130, 16
  %v1707 = vpop.permute.xlu0 %1706
  %1710 = vrot.lane.b32.xlu0 %v133, 20
  %v1711 = vpop.permute.xlu0 %1710
  %1712 = vrot.lane.b32.xlu0 %v136, 20
  %v1713 = vpop.permute.xlu0 %1712
  %1716 = vrot.lane.b32.xlu0 %v139, 24
  %v1717 = vpop.permute.xlu0 %1716
  %1718 = vrot.lane.b32.xlu0 %v142, 24
  %v1719 = vpop.permute.xlu0 %1718
  %v1722 = vsel %vm168, %v1699, %v1705
  %v1723 = vsel %vm168, %v1701, %v1707
  %v1724 = vsel %vm171, %v1722, %v1711
  %v1725 = vsel %vm171, %v1723, %v1713
  %v1726 = vsel %vm174, %v1724, %v1717
  %v1727 = vsel %vm174, %v1725, %v1719
  %v1729 = vsel %vm78, %v65, 0
  %1731 = vmatpush.msra.mxu0 0.0
  %1732 = vmatpush.msra.mxu0 0.0
  %1733 = vmatpush.msra.mxu0 0.0
  %1734 = vmatpush.msra.mxu0 0.0
  %1735 = vmatpush.msra.mxu0 0.0
  %1736 = vmatpush.msra.mxu0 0.0
  %1737 = vmatpush.msra.mxu0 0.0
  %1738 = vmatpush.msra.mxu0 0.0
  %1739 = vmatpush.msra.mxu0 0.0
  %1740 = vmatpush.msra.mxu0 0.0
  %1741 = vmatpush.msra.mxu0 0.0
  %1742 = vmatpush.msra.mxu0 0.0
  %1743 = vmatpush.msra.mxu0 0.0
  %1744 = vmatpush.msra.mxu0 0.0
  %1745 = vmatpush.msra.mxu0 %v1727
  %1746 = vmatpush.msra.mxu0 %v1726
  %1747 = vmatmul.f32.gmra.mxu0 %v1729
  %v1748 = vpop.f32.mrf.mxu0
  %v1749 = vadd.f32 0.0, %v1748
  %1750 = vdwg.mxu0
  %1751 = vst.msk [vmem:[%s4 + $0x74] sm:$0xf] %vm200, %v1749
  %1752 = vrot.lane.b32.xlu0 %v121, 8
  %v1753 = vpop.permute.xlu0 %1752
  %1754 = vrot.lane.b32.xlu0 %v124, 8
  %v1755 = vpop.permute.xlu0 %1754
  %1758 = vrot.lane.b32.xlu0 %v127, 12
  %v1759 = vpop.permute.xlu0 %1758
  %1760 = vrot.lane.b32.xlu0 %v130, 12
  %v1761 = vpop.permute.xlu0 %1760
  %1764 = vrot.lane.b32.xlu0 %v133, 16
  %v1765 = vpop.permute.xlu0 %1764
  %1766 = vrot.lane.b32.xlu0 %v136, 16
  %v1767 = vpop.permute.xlu0 %1766
  %1770 = vrot.lane.b32.xlu0 %v139, 20
  %v1771 = vpop.permute.xlu0 %1770
  %1772 = vrot.lane.b32.xlu0 %v142, 20
  %v1773 = vpop.permute.xlu0 %1772
  %v1776 = vsel %vm168, %v1753, %v1759
  %v1777 = vsel %vm168, %v1755, %v1761
  %v1778 = vsel %vm171, %v1776, %v1765
  %v1779 = vsel %vm171, %v1777, %v1767
  %v1780 = vsel %vm174, %v1778, %v1771
  %v1781 = vsel %vm174, %v1779, %v1773
  %v1783 = vsel %vm78, %v66, 0
  %1785 = vmatpush.msra.mxu0 0.0
  %1786 = vmatpush.msra.mxu0 0.0
  %1787 = vmatpush.msra.mxu0 0.0
  %1788 = vmatpush.msra.mxu0 0.0
  %1789 = vmatpush.msra.mxu0 0.0
  %1790 = vmatpush.msra.mxu0 0.0
  %1791 = vmatpush.msra.mxu0 0.0
  %1792 = vmatpush.msra.mxu0 0.0
  %1793 = vmatpush.msra.mxu0 0.0
  %1794 = vmatpush.msra.mxu0 0.0
  %1795 = vmatpush.msra.mxu0 0.0
  %1796 = vmatpush.msra.mxu0 0.0
  %1797 = vmatpush.msra.mxu0 0.0
  %1798 = vmatpush.msra.mxu0 0.0
  %1799 = vmatpush.msra.mxu0 %v1781
  %1800 = vmatpush.msra.mxu0 %v1780
  %1801 = vmatmul.f32.gmra.mxu0 %v1783
  %v1802 = vpop.f32.mrf.mxu0
  %v1803 = vadd.f32 0.0, %v1802
  %1804 = vdwg.mxu0
  %1805 = vst.msk [vmem:[%s4 + $0x78] sm:$0xf] %vm200, %v1803
  %1806 = vrot.lane.b32.xlu0 %v121, 4
  %v1807 = vpop.permute.xlu0 %1806
  %1808 = vrot.lane.b32.xlu0 %v124, 4
  %v1809 = vpop.permute.xlu0 %1808
  %1812 = vrot.lane.b32.xlu0 %v127, 8
  %v1813 = vpop.permute.xlu0 %1812
  %1814 = vrot.lane.b32.xlu0 %v130, 8
  %v1815 = vpop.permute.xlu0 %1814
  %1818 = vrot.lane.b32.xlu0 %v133, 12
  %v1819 = vpop.permute.xlu0 %1818
  %1820 = vrot.lane.b32.xlu0 %v136, 12
  %v1821 = vpop.permute.xlu0 %1820
  %1824 = vrot.lane.b32.xlu0 %v139, 16
  %v1825 = vpop.permute.xlu0 %1824
  %1826 = vrot.lane.b32.xlu0 %v142, 16
  %v1827 = vpop.permute.xlu0 %1826
  %v1830 = vsel %vm168, %v1807, %v1813
  %v1831 = vsel %vm168, %v1809, %v1815
  %v1832 = vsel %vm171, %v1830, %v1819
  %v1833 = vsel %vm171, %v1831, %v1821
  %v1834 = vsel %vm174, %v1832, %v1825
  %v1835 = vsel %vm174, %v1833, %v1827
  %v1837 = vsel %vm78, %v67, 0
  %1839 = vmatpush.msra.mxu0 0.0
  %1840 = vmatpush.msra.mxu0 0.0
  %1841 = vmatpush.msra.mxu0 0.0
  %1842 = vmatpush.msra.mxu0 0.0
  %1843 = vmatpush.msra.mxu0 0.0
  %1844 = vmatpush.msra.mxu0 0.0
  %1845 = vmatpush.msra.mxu0 0.0
  %1846 = vmatpush.msra.mxu0 0.0
  %1847 = vmatpush.msra.mxu0 0.0
  %1848 = vmatpush.msra.mxu0 0.0
  %1849 = vmatpush.msra.mxu0 0.0
  %1850 = vmatpush.msra.mxu0 0.0
  %1851 = vmatpush.msra.mxu0 0.0
  %1852 = vmatpush.msra.mxu0 0.0
  %1853 = vmatpush.msra.mxu0 %v1835
  %1854 = vmatpush.msra.mxu0 %v1834
  %1855 = vmatmul.f32.gmra.mxu0 %v1837
  %v1856 = vpop.f32.mrf.mxu0
  %v1857 = vadd.f32 0.0, %v1856
  %1858 = vdwg.mxu0
  %1859 = vst.msk [vmem:[%s4 + $0x7c] sm:$0xf] %vm200, %v1857
  // Predicated region
  $region14: #{tpu_custom_call.1} parent=0 // pred_check
    _
  $region15: #{tpu_custom_call.1} parent=0 // pred_check_branch
    %1861 = sbr.rel (0) target = $region17
  $region16: #{tpu_custom_call.1} parent=0 // pred_region
    _
  $region17: #{tpu_custom_call.1} parent=0 // pred_fallthru
    _
  // Predicated region
  $region18: #{tpu_custom_call.1} parent=0 // pred_check
    _
  $region19: #{tpu_custom_call.1} parent=0 // pred_check_branch
    %1863 = sbr.rel (0) target = $region21
  $region20: #{tpu_custom_call.1} parent=0 // pred_region
    _
  $region21: #{tpu_custom_call.1} parent=0 // pred_fallthru
    _

</llo_original>
